<compile_context>
chip_gen: v6e
topology: v6e:2x2x1
jax: 0.10.0
libtpu: 0.0.40
codegen_flags: <defaults>
</compile_context>

<pallas_src>
import functools

import jax
import jax.numpy as jnp
from jax.experimental import pallas as pl
from jax.experimental.pallas import tpu as pltpu


def _round_up(n, m):
    return ((n + m - 1) // m) * m


def _pick_vmem_limit():
    """Generation-aware VMEM budget: 75% of physical, capped at 112 MiB."""
    cap = 64 * 1024 * 1024  # conservative fallback (v7x-sized)
    try:
        info = pltpu.get_tpu_info()
        cap = int(getattr(info, "vmem_capacity_bytes", cap))
    except Exception:
        pass
    return min((cap * 3) // 4, 112 * 1024 * 1024)


_VMEM_LIMIT_BYTES = _pick_vmem_limit()


def _resident_spec(block_shape):
    """Constant-index (resident) block spec; single-buffered where supported."""
    idx = lambda i: (0, 0)
    if hasattr(pl, "Buffered"):
        try:
            return pl.BlockSpec(block_shape, idx, pipeline_mode=pl.Buffered(1))
        except TypeError:
            pass
    return pl.BlockSpec(block_shape, idx)


def _mlp_kernel(x_ref, w1_ref, b1_ref, w2_ref, b2_ref, w3_ref, b3_ref, o_ref):
    """Fused 3-layer MLP: (Linear+ReLU) x2 + Linear.

    x is read in f32 and cast to bf16 in-kernel; weights are pre-cast bf16;
    all matmuls accumulate in f32 and bias/ReLU math stays in f32.
    """
    x = x_ref[...].astype(jnp.bfloat16)                       # (blk, d_in)
    h1 = jnp.dot(x, w1_ref[...], preferred_element_type=jnp.float32) + b1_ref[...]
    h1 = jnp.maximum(h1, 0.0)                                 # (blk, h_p) f32
    h2 = (
        jnp.dot(h1.astype(jnp.bfloat16), w2_ref[...],
                preferred_element_type=jnp.float32)
        + b2_ref[...]
    )
    h2 = jnp.maximum(h2, 0.0)                                 # (blk, h_p) f32
    out = (
        jnp.dot(h2.astype(jnp.bfloat16), w3_ref[...],
                preferred_element_type=jnp.float32)
        + b3_ref[...]
    )                                                         # (blk, ydim) f32
    o_ref[...] = out.astype(o_ref.dtype)


def prepare_params(params):
    """One-time pad (hidden dim -> multiple of 128) + bf16 cast of the weights.

    Keeps d_in and ydim at their true sizes (full-dim blocks are legal), so the
    only padding is on the hidden dimension, where zero rows/cols + zero bias
    pad + ReLU(0)=0 keep the extra lanes mathematically inert.
    """
    w1, b1, w2, b2, w3, b3 = params
    h = w1.shape[1]
    h_p = _round_up(h, 128)
    ph = h_p - h
    w1p = jnp.pad(w1, ((0, 0), (0, ph))).astype(jnp.bfloat16)   # (d_in, h_p)
    w2p = jnp.pad(w2, ((0, ph), (0, ph))).astype(jnp.bfloat16)  # (h_p,  h_p)
    w3p = jnp.pad(w3, ((0, ph), (0, 0))).astype(jnp.bfloat16)   # (h_p,  ydim)
    b1p = jnp.pad(b1, ((0, 0), (0, ph))).astype(jnp.float32)    # (1, h_p)
    b2p = jnp.pad(b2, ((0, 0), (0, ph))).astype(jnp.float32)    # (1, h_p)
    b3p = b3.astype(jnp.float32)                                # (1, ydim)
    return (w1p, b1p, w2p, b2p, w3p, b3p)


@functools.partial(jax.jit, static_argnames=("block_b",))
def nn_forward(x, padded_params, block_b=1024):
    """Fused MLP as a single Pallas kernel, tiled only over the batch dim.

    `padded_params` must come from `prepare_params` (pre-padded, bf16 weights).
    """
    w1p, b1p, w2p, b2p, w3p, b3p = padded_params
    B, d_in = x.shape
    d_in_w, h_p = w1p.shape
    assert d_in == d_in_w, "x feature dim must match W1"
    ydim = w3p.shape[1]

    # Adaptive batch tile: big (amortize ~0.35us/step), multiple of 8, and
    # clamped so the grid keeps >= 2 steps (v7x megacore gets both TCs busy).
    blk = min(
        _round_up(block_b, 8),
        _round_up(B, 8),
        _round_up(pl.cdiv(B, 2), 8),
    )
    blk = max(blk, 8)
    grid = (pl.cdiv(B, blk),)   # ragged last block handled by Pallas masking

    flops = 2 * B * (d_in * h_p + h_p * h_p + h_p * ydim)
    bytes_accessed = (
        B * d_in * 4                                   # x read (f32)
        + (w1p.size + w2p.size + w3p.size) * 2         # bf16 weights
        + (b1p.size + b2p.size + b3p.size) * 4         # f32 biases
        + B * ydim * 4                                 # output write
    )

    in_specs = [
        pl.BlockSpec((blk, d_in), lambda i: (i, 0)),   # x tile (true d_in)
        _resident_spec((d_in, h_p)),                   # W1 (resident)
        _resident_spec((1, h_p)),                      # b1
        _resident_spec((h_p, h_p)),                    # W2 (resident)
        _resident_spec((1, h_p)),                      # b2
        _resident_spec((h_p, ydim)),                   # W3 (resident, true ydim)
        _resident_spec((1, ydim)),                     # b3
    ]
    out_spec = pl.BlockSpec((blk, ydim), lambda i: (i, 0))   # true-width output

    out = pl.pallas_call(
        _mlp_kernel,
        out_shape=jax.ShapeDtypeStruct((B, ydim), jnp.float32),
        grid_spec=pltpu.PrefetchScalarGridSpec(
            num_scalar_prefetch=0,
            grid=grid,
            in_specs=in_specs,
            out_specs=out_spec,
        ),
        compiler_params=pltpu.CompilerParams(
            dimension_semantics=("parallel",),
            vmem_limit_bytes=_VMEM_LIMIT_BYTES,
        ),
        cost_estimate=pl.CostEstimate(
            flops=flops, transcendentals=0, bytes_accessed=bytes_accessed
        ),
    )(x, w1p, b1p, w2p, b2p, w3p, b3p)

    return out


def init_params(key, d_in, hidden, ydim):
    """Deterministic parameter init mirroring the PyTorch module.

    nn.init.kaiming_normal_ on Linear weights (fan_in mode, relu gain sqrt(2)),
    default nn.Linear uniform(-1/sqrt(fan_in), 1/sqrt(fan_in)) for biases.
    Weights are stored as (in, out) so the kernel computes x @ W (== x @ W_pt.T).
    """
    sizes = [(d_in, hidden), (hidden, hidden), (hidden, ydim)]
    keys = jax.random.split(key, 2 * len(sizes))
    params = []
    for idx, (fan_in, fan_out) in enumerate(sizes):
        wk, bk = keys[2 * idx], keys[2 * idx + 1]
        std = (2.0 / fan_in) ** 0.5
        w = std * jax.random.normal(wk, (fan_in, fan_out), dtype=jnp.float32)
        bound = 1.0 / (fan_in ** 0.5)
        b = jax.random.uniform(
            bk, (1, fan_out), dtype=jnp.float32, minval=-bound, maxval=bound
        )
        params.extend([w, b])
    return tuple(params)


def nn_forward_ref(x, params, compute_dtype=jnp.float32):
    """Plain-JAX reference.  compute_dtype=bf16 mirrors the kernel's MXU casts."""
    w1, b1, w2, b2, w3, b3 = params

    def mm(a, w):
        return jnp.dot(
            a.astype(compute_dtype),
            w.astype(compute_dtype),
            preferred_element_type=jnp.float32,
        )

    h1 = jnp.maximum(mm(x, w1) + b1, 0.0)
    h2 = jnp.maximum(mm(h1, w2) + b2, 0.0)
    return mm(h2, w3) + b3


if __name__ == "__main__":
    # Shapes consistent with the module: encoded_xdim=16, hiddenSize=32, ydim=8.
    # B=500 is deliberately not a multiple of the tile: exercises the ragged
    # last batch block and the grid>=2 clamp (2 steps of 256 rows).
    B, D_IN, HIDDEN, YDIM = 500, 16, 32, 8

    key = jax.random.PRNGKey(0)
    pkey, xkey = jax.random.split(key)
    params = init_params(pkey, D_IN, HIDDEN, YDIM)
    padded_params = prepare_params(params)   # one-time pad + bf16 cast
    x = jax.random.normal(xkey, (B, D_IN), dtype=jnp.float32)

    out = nn_forward(x, padded_params)
    out = jax.block_until_ready(out)
    assert out.shape == (B, YDIM)

    # Tight check vs a matched-precision (bf16 operand / f32 accum) reference.
    ref_bf16 = nn_forward_ref(x, params, compute_dtype=jnp.bfloat16)
    assert jnp.allclose(out, ref_bf16, atol=2e-3, rtol=2e-3), \
        "mismatch vs bf16-matched reference"

    # Loose sanity check vs the exact f32 PyTorch-equivalent math (bf16-level tol).
    ref_f32 = nn_forward_ref(x, params, compute_dtype=jnp.float32)
    assert jnp.allclose(out, ref_f32, atol=3e-1, rtol=1e-1), \
        "mismatch vs f32 reference"

    print("KERNEL_OK")
</pallas_src>

<mosaic_0001>
module attributes {stable_mosaic.version = 11 : i64} {
  func.func @_mlp_kernel(%arg0: i32, %arg1: memref<256x16xf32, #tpu.memory_space<vmem>>, %arg2: memref<16x128xbf16, #tpu.memory_space<vmem>>, %arg3: memref<1x128xf32, #tpu.memory_space<vmem>>, %arg4: memref<128x128xbf16, #tpu.memory_space<vmem>>, %arg5: memref<1x128xf32, #tpu.memory_space<vmem>>, %arg6: memref<128x8xbf16, #tpu.memory_space<vmem>>, %arg7: memref<1x8xf32, #tpu.memory_space<vmem>>, %arg8: memref<256x8xf32, #tpu.memory_space<vmem>>) attributes {dimension_semantics = [#tpu.dimension_semantics<parallel>], iteration_bounds = array<i64: 2>, scalar_prefetch = 0 : i64, scratch_operands = 0 : i64, tpu.core_type = #tpu.core_type<tc>, window_params = [{transform_indices = @transform_0, window_bounds = array<i64: 256, 16>}, {pipeline_mode = #tpu.pipeline_mode<synchronous>, transform_indices = @transform_1, window_bounds = array<i64: 16, 128>}, {pipeline_mode = #tpu.pipeline_mode<synchronous>, transform_indices = @transform_2, window_bounds = array<i64: 1, 128>}, {pipeline_mode = #tpu.pipeline_mode<synchronous>, transform_indices = @transform_3, window_bounds = array<i64: 128, 128>}, {pipeline_mode = #tpu.pipeline_mode<synchronous>, transform_indices = @transform_4, window_bounds = array<i64: 1, 128>}, {pipeline_mode = #tpu.pipeline_mode<synchronous>, transform_indices = @transform_5, window_bounds = array<i64: 128, 8>}, {pipeline_mode = #tpu.pipeline_mode<synchronous>, transform_indices = @transform_6, window_bounds = array<i64: 1, 8>}, {transform_indices = @transform_7, window_bounds = array<i64: 256, 8>}]} {
    %c0 = arith.constant 0 : index
    %c0_0 = arith.constant 0 : index
    %0 = vector.load %arg1[%c0, %c0_0] : memref<256x16xf32, #tpu.memory_space<vmem>>, vector<256x16xf32>
    %1 = arith.truncf %0 : vector<256x16xf32> to vector<256x16xbf16>
    %c0_1 = arith.constant 0 : index
    %c0_2 = arith.constant 0 : index
    %2 = vector.load %arg2[%c0_1, %c0_2] : memref<16x128xbf16, #tpu.memory_space<vmem>>, vector<16x128xbf16>
    %cst = arith.constant dense<0.000000e+00> : vector<256x128xf32>
    %3 = tpu.matmul %1, %2, %cst {dimension_numbers = #tpu.dot_dimension_numbers<[1], [0], [0], [1], [0, 0, 1, 1], [], []>} : vector<256x16xbf16>, vector<16x128xbf16>, vector<256x128xf32> -> vector<256x128xf32>
    %c0_3 = arith.constant 0 : index
    %c0_4 = arith.constant 0 : index
    %4 = vector.load %arg3[%c0_3, %c0_4] : memref<1x128xf32, #tpu.memory_space<vmem>>, vector<1x128xf32>
    %5 = vector.broadcast %4 : vector<1x128xf32> to vector<256x128xf32>
    %6 = arith.addf %3, %5 : vector<256x128xf32>
    %cst_5 = arith.constant 0.000000e+00 : f32
    %7 = vector.broadcast %cst_5 : f32 to vector<256x128xf32>
    %8 = arith.maximumf %6, %7 : vector<256x128xf32>
    %9 = arith.truncf %8 : vector<256x128xf32> to vector<256x128xbf16>
    %c0_6 = arith.constant 0 : index
    %c0_7 = arith.constant 0 : index
    %10 = vector.load %arg4[%c0_6, %c0_7] : memref<128x128xbf16, #tpu.memory_space<vmem>>, vector<128x128xbf16>
    %cst_8 = arith.constant dense<0.000000e+00> : vector<256x128xf32>
    %11 = tpu.matmul %9, %10, %cst_8 {dimension_numbers = #tpu.dot_dimension_numbers<[1], [0], [0], [1], [0, 0, 1, 1], [], []>} : vector<256x128xbf16>, vector<128x128xbf16>, vector<256x128xf32> -> vector<256x128xf32>
    %c0_9 = arith.constant 0 : index
    %c0_10 = arith.constant 0 : index
    %12 = vector.load %arg5[%c0_9, %c0_10] : memref<1x128xf32, #tpu.memory_space<vmem>>, vector<1x128xf32>
    %13 = vector.broadcast %12 : vector<1x128xf32> to vector<256x128xf32>
    %14 = arith.addf %11, %13 : vector<256x128xf32>
    %cst_11 = arith.constant 0.000000e+00 : f32
    %15 = vector.broadcast %cst_11 : f32 to vector<256x128xf32>
    %16 = arith.maximumf %14, %15 : vector<256x128xf32>
    %17 = arith.truncf %16 : vector<256x128xf32> to vector<256x128xbf16>
    %c0_12 = arith.constant 0 : index
    %c0_13 = arith.constant 0 : index
    %18 = vector.load %arg6[%c0_12, %c0_13] : memref<128x8xbf16, #tpu.memory_space<vmem>>, vector<128x8xbf16>
    %cst_14 = arith.constant dense<0.000000e+00> : vector<256x8xf32>
    %19 = tpu.matmul %17, %18, %cst_14 {dimension_numbers = #tpu.dot_dimension_numbers<[1], [0], [0], [1], [0, 0, 1, 1], [], []>} : vector<256x128xbf16>, vector<128x8xbf16>, vector<256x8xf32> -> vector<256x8xf32>
    %c0_15 = arith.constant 0 : index
    %c0_16 = arith.constant 0 : index
    %20 = vector.load %arg7[%c0_15, %c0_16] : memref<1x8xf32, #tpu.memory_space<vmem>>, vector<1x8xf32>
    %21 = vector.broadcast %20 : vector<1x8xf32> to vector<256x8xf32>
    %22 = arith.addf %19, %21 : vector<256x8xf32>
    %c0_17 = arith.constant 0 : index
    %c0_18 = arith.constant 0 : index
    %23 = vector.load %arg8[%c0_17, %c0_18] : memref<256x8xf32, #tpu.memory_space<vmem>>, vector<256x8xf32>
    tpu.vector_store %arg8[%c0_17, %c0_18], %22 {strides = array<i32>} : memref<256x8xf32, #tpu.memory_space<vmem>>, vector<256x8xf32>,
    return
  }
  func.func @transform_0(%arg0: i32) -> (i32, i32) {
    %c0_i32 = arith.constant 0 : i32
    %c0_i32_0 = arith.constant 0 : i32
    return %arg0, %c0_i32 : i32, i32
  }
  func.func @transform_1(%arg0: i32) -> (i32, i32) {
    %c0_i32 = arith.constant 0 : i32
    %c0_i32_0 = arith.constant 0 : i32
    %c0_i32_1 = arith.constant 0 : i32
    return %c0_i32, %c0_i32_0 : i32, i32
  }
  func.func @transform_2(%arg0: i32) -> (i32, i32) {
    %c0_i32 = arith.constant 0 : i32
    %c0_i32_0 = arith.constant 0 : i32
    %c0_i32_1 = arith.constant 0 : i32
    return %c0_i32, %c0_i32_0 : i32, i32
  }
  func.func @transform_3(%arg0: i32) -> (i32, i32) {
    %c0_i32 = arith.constant 0 : i32
    %c0_i32_0 = arith.constant 0 : i32
    %c0_i32_1 = arith.constant 0 : i32
    return %c0_i32, %c0_i32_0 : i32, i32
  }
  func.func @transform_4(%arg0: i32) -> (i32, i32) {
    %c0_i32 = arith.constant 0 : i32
    %c0_i32_0 = arith.constant 0 : i32
    %c0_i32_1 = arith.constant 0 : i32
    return %c0_i32, %c0_i32_0 : i32, i32
  }
  func.func @transform_5(%arg0: i32) -> (i32, i32) {
    %c0_i32 = arith.constant 0 : i32
    %c0_i32_0 = arith.constant 0 : i32
    %c0_i32_1 = arith.constant 0 : i32
    return %c0_i32, %c0_i32_0 : i32, i32
  }
  func.func @transform_6(%arg0: i32) -> (i32, i32) {
    %c0_i32 = arith.constant 0 : i32
    %c0_i32_0 = arith.constant 0 : i32
    %c0_i32_1 = arith.constant 0 : i32
    return %c0_i32, %c0_i32_0 : i32, i32
  }
  func.func @transform_7(%arg0: i32) -> (i32, i32) {
    %c0_i32 = arith.constant 0 : i32
    %c0_i32_0 = arith.constant 0 : i32
    return %arg0, %c0_i32 : i32, i32
  }
}

</mosaic_0001>

<llo_original>
// kernel: nn_forward.1
$region0: #{nn_forward.1}
  #allocation0 [shape = 'u32[]', space=smem, size = 0x4, offset = 0x4, fixed_abs, tag = 'smem constant byte address 0x4 - core index']
  #allocation1 [shape = 'u32[144,128]{1,0:T(1,128)}', space=vmem, size = 0x12000, scoped, tag = 'internal scratch']
  %s0 = inlined_call_operand.vmem [shape: f32[500,16], index: 0, kind: input, shape index: {}]
  %s1 = inlined_call_operand.vmem [shape: bf16[16,128], index: 1, kind: input, shape index: {}]
  %s2 = inlined_call_operand.vmem [shape: f32[1,128], index: 2, kind: input, shape index: {}]
  %s3 = inlined_call_operand.vmem [shape: bf16[128,128], index: 3, kind: input, shape index: {}]
  %s4 = inlined_call_operand.vmem [shape: f32[1,128], index: 4, kind: input, shape index: {}]
  %s5 = inlined_call_operand.vmem [shape: bf16[128,8], index: 5, kind: input, shape index: {}]
  %s6 = inlined_call_operand.vmem [shape: f32[1,8], index: 6, kind: input, shape index: {}]
  %s7 = inlined_call_operand.vmem [shape: f32[500,8], index: 7, kind: output, shape index: {}]
  %s8 = sld [smem:[#allocation0]]
  $region109: #{nn_forward.1} parent=0
    _
  %s10 = ssub.s32 1, %s8
  %s11 = scalar_select 0, %s10, %s8
  $region1: #{nn_forward.1} parent=0
    #allocation2 [shape = 'u8[262144]{0}', space=vmem, size = 0x40000, scoped, tag = 'output window, operand 0']
    loop: start=0, step=1, limit=4
    $region2: #{nn_forward.1} parent=1 // loop_pre_header
      _
    $region3: #{nn_forward.1} parent=1 // loop_header
      %s13 = sphi 0, %s17
      %p14 = scmp.ge.s32.totalorder %s13, 4
      %s23 = sphi 0, %s25
      %s26 = sphi 0, %s23
      %s27 = sphi 0, %s26
      %s43 = sphi 0, %s27
      %s47 = sphi 0, %s47
      %s49 = sphi 0, %s47
      %s50 = sphi 0, %s49
      %s64 = sphi 0, %s50
      %s68 = sphi 0, %s68
      %s70 = sphi 0, %s68
      %s71 = sphi 0, %s70
      %s85 = sphi 0, %s71
      %s89 = sphi 0, %s89
      %s91 = sphi 0, %s89
      %s92 = sphi 0, %s91
      %s106 = sphi 0, %s92
      %s110 = sphi 0, %s110
      %s112 = sphi 0, %s110
      %s113 = sphi 0, %s112
      %s127 = sphi 0, %s113
      %s131 = sphi 0, %s131
      %s133 = sphi 0, %s131
      %s134 = sphi 0, %s133
      %s148 = sphi 0, %s134
      %s152 = sphi 0, %s152
      %s154 = sphi 0, %s152
      %s155 = sphi 0, %s154
      %s169 = sphi 0, %s155
      %s175 = sphi 0, %s177
      %s178 = sphi 0, %s175
      %s179 = sphi 0, %s178
      %s195 = sphi 0, %s179
    $region4: #{nn_forward.1} parent=1 // loop_header_branch
      %16 = sbr.rel (%p14) target = $region8
    $region5: #{nn_forward.1} parent=1 // loop_body
      %s18 = ssub.s32 %s13, 1
      %s19 = ssub.s32 %s13, 2
      %s20 = sadd.s32 %s13, 1
      %s21 = ssub.s32 %s13, %s20
      %p22 = scmp.eq.s32.totalorder %s21, 0
      %s24 = sadd.s32 %s23, 1
      %s25 = scalar_select %p22, %s23, %s24
      %p28 = pneg %p22
      %p29 = scmp.eq.s32.totalorder %s13, 1
      %p30 = por %p28, %p29
      %p31 = scmp.ne.s32.totalorder %s23, %s26
      %p32 = scmp.eq.s32.totalorder %s13, 0
      %p33 = por %p31, %p32
      %p34 = scmp.ne.s32.totalorder %s23, %s26
      %p35 = scmp.eq.s32.totalorder %s18, 1
      %p36 = por %p34, %p35
      %p37 = scmp.ne.s32.totalorder %s26, %s27
      %p38 = scmp.eq.s32.totalorder %s18, 0
      %p39 = por %p37, %p38
      %p40 = scmp.ne.s32.totalorder %s26, %s27
      %p41 = scmp.eq.s32.totalorder %s19, 1
      %p42 = por %p40, %p41
      %p44 = scmp.ne.s32.totalorder %s27, %s43
      %p45 = scmp.eq.s32.totalorder %s19, 0
      %p46 = por %p44, %p45
      %s48 = sadd.s32 %s47, 1
      %p51 = scmp.eq.s32.totalorder %s13, 1
      %p52 = scmp.ne.s32.totalorder %s47, %s49
      %p53 = scmp.eq.s32.totalorder %s13, 0
      %p54 = por %p52, %p53
      %p55 = scmp.ne.s32.totalorder %s47, %s49
      %p56 = scmp.eq.s32.totalorder %s18, 1
      %p57 = por %p55, %p56
      %p58 = scmp.ne.s32.totalorder %s49, %s50
      %p59 = scmp.eq.s32.totalorder %s18, 0
      %p60 = por %p58, %p59
      %p61 = scmp.ne.s32.totalorder %s49, %s50
      %p62 = scmp.eq.s32.totalorder %s19, 1
      %p63 = por %p61, %p62
      %p65 = scmp.ne.s32.totalorder %s50, %s64
      %p66 = scmp.eq.s32.totalorder %s19, 0
      %p67 = por %p65, %p66
      %s69 = sadd.s32 %s68, 1
      %p72 = scmp.eq.s32.totalorder %s13, 1
      %p73 = scmp.ne.s32.totalorder %s68, %s70
      %p74 = scmp.eq.s32.totalorder %s13, 0
      %p75 = por %p73, %p74
      %p76 = scmp.ne.s32.totalorder %s68, %s70
      %p77 = scmp.eq.s32.totalorder %s18, 1
      %p78 = por %p76, %p77
      %p79 = scmp.ne.s32.totalorder %s70, %s71
      %p80 = scmp.eq.s32.totalorder %s18, 0
      %p81 = por %p79, %p80
      %p82 = scmp.ne.s32.totalorder %s70, %s71
      %p83 = scmp.eq.s32.totalorder %s19, 1
      %p84 = por %p82, %p83
      %p86 = scmp.ne.s32.totalorder %s71, %s85
      %p87 = scmp.eq.s32.totalorder %s19, 0
      %p88 = por %p86, %p87
      %s90 = sadd.s32 %s89, 1
      %p93 = scmp.eq.s32.totalorder %s13, 1
      %p94 = scmp.ne.s32.totalorder %s89, %s91
      %p95 = scmp.eq.s32.totalorder %s13, 0
      %p96 = por %p94, %p95
      %p97 = scmp.ne.s32.totalorder %s89, %s91
      %p98 = scmp.eq.s32.totalorder %s18, 1
      %p99 = por %p97, %p98
      %p100 = scmp.ne.s32.totalorder %s91, %s92
      %p101 = scmp.eq.s32.totalorder %s18, 0
      %p102 = por %p100, %p101
      %p103 = scmp.ne.s32.totalorder %s91, %s92
      %p104 = scmp.eq.s32.totalorder %s19, 1
      %p105 = por %p103, %p104
      %p107 = scmp.ne.s32.totalorder %s92, %s106
      %p108 = scmp.eq.s32.totalorder %s19, 0
      %p109 = por %p107, %p108
      %s111 = sadd.s32 %s110, 1
      %p114 = scmp.eq.s32.totalorder %s13, 1
      %p115 = scmp.ne.s32.totalorder %s110, %s112
      %p116 = scmp.eq.s32.totalorder %s13, 0
      %p117 = por %p115, %p116
      %p118 = scmp.ne.s32.totalorder %s110, %s112
      %p119 = scmp.eq.s32.totalorder %s18, 1
      %p120 = por %p118, %p119
      %p121 = scmp.ne.s32.totalorder %s112, %s113
      %p122 = scmp.eq.s32.totalorder %s18, 0
      %p123 = por %p121, %p122
      %p124 = scmp.ne.s32.totalorder %s112, %s113
      %p125 = scmp.eq.s32.totalorder %s19, 1
      %p126 = por %p124, %p125
      %p128 = scmp.ne.s32.totalorder %s113, %s127
      %p129 = scmp.eq.s32.totalorder %s19, 0
      %p130 = por %p128, %p129
      %s132 = sadd.s32 %s131, 1
      %p135 = scmp.eq.s32.totalorder %s13, 1
      %p136 = scmp.ne.s32.totalorder %s131, %s133
      %p137 = scmp.eq.s32.totalorder %s13, 0
      %p138 = por %p136, %p137
      %p139 = scmp.ne.s32.totalorder %s131, %s133
      %p140 = scmp.eq.s32.totalorder %s18, 1
      %p141 = por %p139, %p140
      %p142 = scmp.ne.s32.totalorder %s133, %s134
      %p143 = scmp.eq.s32.totalorder %s18, 0
      %p144 = por %p142, %p143
      %p145 = scmp.ne.s32.totalorder %s133, %s134
      %p146 = scmp.eq.s32.totalorder %s19, 1
      %p147 = por %p145, %p146
      %p149 = scmp.ne.s32.totalorder %s134, %s148
      %p150 = scmp.eq.s32.totalorder %s19, 0
      %p151 = por %p149, %p150
      %s153 = sadd.s32 %s152, 1
      %p156 = scmp.eq.s32.totalorder %s13, 1
      %p157 = scmp.ne.s32.totalorder %s152, %s154
      %p158 = scmp.eq.s32.totalorder %s13, 0
      %p159 = por %p157, %p158
      %p160 = scmp.ne.s32.totalorder %s152, %s154
      %p161 = scmp.eq.s32.totalorder %s18, 1
      %p162 = por %p160, %p161
      %p163 = scmp.ne.s32.totalorder %s154, %s155
      %p164 = scmp.eq.s32.totalorder %s18, 0
      %p165 = por %p163, %p164
      %p166 = scmp.ne.s32.totalorder %s154, %s155
      %p167 = scmp.eq.s32.totalorder %s19, 1
      %p168 = por %p166, %p167
      %p170 = scmp.ne.s32.totalorder %s155, %s169
      %p171 = scmp.eq.s32.totalorder %s19, 0
      %p172 = por %p170, %p171
      %s173 = ssub.s32 %s13, %s20
      %p174 = scmp.eq.s32.totalorder %s173, 0
      %s176 = sadd.s32 %s175, 1
      %s177 = scalar_select %p174, %s175, %s176
      %p180 = pneg %p174
      %p181 = scmp.eq.s32.totalorder %s13, 1
      %p182 = por %p180, %p181
      %p183 = scmp.ne.s32.totalorder %s175, %s178
      %p184 = scmp.eq.s32.totalorder %s13, 0
      %p185 = por %p183, %p184
      %p186 = scmp.ne.s32.totalorder %s175, %s178
      %p187 = scmp.eq.s32.totalorder %s18, 1
      %p188 = por %p186, %p187
      %p189 = scmp.ne.s32.totalorder %s178, %s179
      %p190 = scmp.eq.s32.totalorder %s18, 0
      %p191 = por %p189, %p190
      %p192 = scmp.ne.s32.totalorder %s178, %s179
      %p193 = scmp.eq.s32.totalorder %s19, 1
      %p194 = por %p192, %p193
      %p196 = scmp.ne.s32.totalorder %s179, %s195
      %p197 = scmp.eq.s32.totalorder %s19, 0
      %p198 = por %p196, %p197
      %p199 = scmp.le.s32.totalorder 1, %s13
      %p200 = scmp.lt.s32.totalorder %s13, 3
      %p201 = pnand %p199, %p200
      %p202 = pneg %p201
      // Predicated region
      $region9: #{nn_forward.1} parent=5 // pred_check
        _
      $region10: #{nn_forward.1} parent=5 // pred_check_branch
        %204 = sbr.rel (%p201) target = $region12
      $region11: #{nn_forward.1} parent=5 // pred_region
        %s205 = ssub.s32 %s13, 1
        // Predicated region
        $region13: #{nn_forward.1} parent=11 // pred_check
          %p206 = pneg %p60
        $region14: #{nn_forward.1} parent=11 // pred_check_branch
          %208 = sbr.rel (%p206) target = $region16
        $region15: #{nn_forward.1} parent=11 // pred_region
          _
        $region16: #{nn_forward.1} parent=11 // pred_fallthru
          _
        // Predicated region
        $region17: #{nn_forward.1} parent=11 // pred_check
          %p209 = pneg %p81
        $region18: #{nn_forward.1} parent=11 // pred_check_branch
          %211 = sbr.rel (%p209) target = $region20
        $region19: #{nn_forward.1} parent=11 // pred_region
          _
        $region20: #{nn_forward.1} parent=11 // pred_fallthru
          _
        // Predicated region
        $region21: #{nn_forward.1} parent=11 // pred_check
          %p212 = pneg %p102
        $region22: #{nn_forward.1} parent=11 // pred_check_branch
          %214 = sbr.rel (%p212) target = $region24
        $region23: #{nn_forward.1} parent=11 // pred_region
          _
        $region24: #{nn_forward.1} parent=11 // pred_fallthru
          _
        // Predicated region
        $region25: #{nn_forward.1} parent=11 // pred_check
          %p215 = pneg %p123
        $region26: #{nn_forward.1} parent=11 // pred_check_branch
          %217 = sbr.rel (%p215) target = $region28
        $region27: #{nn_forward.1} parent=11 // pred_region
          _
        $region28: #{nn_forward.1} parent=11 // pred_fallthru
          _
        // Predicated region
        $region29: #{nn_forward.1} parent=11 // pred_check
          %p218 = pneg %p144
        $region30: #{nn_forward.1} parent=11 // pred_check_branch
          %220 = sbr.rel (%p218) target = $region32
        $region31: #{nn_forward.1} parent=11 // pred_region
          _
        $region32: #{nn_forward.1} parent=11 // pred_fallthru
          _
        // Predicated region
        $region33: #{nn_forward.1} parent=11 // pred_check
          %p221 = pneg %p165
        $region34: #{nn_forward.1} parent=11 // pred_check_branch
          %223 = sbr.rel (%p221) target = $region36
        $region35: #{nn_forward.1} parent=11 // pred_region
          _
        $region36: #{nn_forward.1} parent=11 // pred_fallthru
          _
      $region12: #{nn_forward.1} parent=5 // pred_fallthru
        _
      %p224 = scmp.lt.s32.totalorder %s13, 2
      // Predicated region
      $region37: #{nn_forward.1} parent=5 // pred_check
        %p225 = pneg %p224
      $region38: #{nn_forward.1} parent=5 // pred_check_branch
        %227 = sbr.rel (%p225) target = $region40
      $region39: #{nn_forward.1} parent=5 // pred_region
        // Predicated region
        $region41: #{nn_forward.1} parent=39 // pred_check
          %p228 = pneg %p33
        $region42: #{nn_forward.1} parent=39 // pred_check_branch
          %230 = sbr.rel (%p228) target = $region44
        $region43: #{nn_forward.1} parent=39 // pred_region
          %s231 = smul.u32 32, %s13
          %s232 = ssub.s32 63, %s231
          %p233 = scmp.lt.s32.totalorder %s232, 32
          %s234 = scalar_select %p233, %s232, 32
          %s235 = smul.u32 128, %s234
          %p236 = scmp.lt.s32.totalorder %s231, 62
          %s237 = scalar_select %p236, %s231, 62
          %s238 = smul.addr %s237, 8
          %s239 = scalar_lea.vmem %s0, %s238
          %s240 = smul.u32 32, %s13
          %s241 = ssub.s32 63, %s240
          %p242 = scmp.lt.s32.totalorder %s241, 32
          %s243 = scalar_select %p242, %s241, 32
          %s244 = smul.u32 128, %s243
        $region44: #{nn_forward.1} parent=39 // pred_fallthru
          _
      $region40: #{nn_forward.1} parent=5 // pred_fallthru
        _
      %p245 = scmp.le.s32.totalorder 1, %s13
      %p246 = scmp.lt.s32.totalorder %s13, 3
      %p247 = pnand %p245, %p246
      %p248 = pneg %p247
      // Predicated region
      $region45: #{nn_forward.1} parent=5 // pred_check
        _
      $region46: #{nn_forward.1} parent=5 // pred_check_branch
        %250 = sbr.rel (%p247) target = $region48
      $region47: #{nn_forward.1} parent=5 // pred_region
        %s251 = ssub.s32 %s13, 1
        %s252 = smul.u32 32, %s18
        %s253 = ssub.s32 63, %s252
        %p254 = scmp.lt.s32.totalorder %s253, 32
        %s255 = scalar_select %p254, %s253, 32
        %s256 = smul.u32 128, %s255
        %p257 = scmp.lt.s32.totalorder %s252, 62
        %s258 = scalar_select %p257, %s252, 62
        %s259 = smul.addr %s258, 8
        %s260 = scalar_lea.vmem %s0, %s259
        %p261 = pneg %p39
        %p262 = pneg %p36
        %p263 = pneg %p60
        %p264 = pneg %p57
        %p265 = pneg %p81
        %p266 = pneg %p78
        %p267 = pneg %p102
        %p268 = pneg %p99
        %p269 = pneg %p123
        %p270 = pneg %p120
        %p271 = pneg %p144
        %p272 = pneg %p141
        %p273 = pneg %p165
        %p274 = pneg %p162
        %p275 = pneg %p191
        %p276 = pneg %p188
        %s277 = sand.u32 %s178, 1
        %s278 = sand.u32 %s178, 1
        %s279 = smul.addr %s278, 256
        %s280 = scalar_lea.vmem [#allocation2], %s279
        %s281 = smul.u32 32, %s18
        %s282 = ssub.s32 63, %s281
        %p283 = scmp.lt.s32.totalorder %s282, 32
        %s284 = scalar_select %p283, %s282, 32
        %s285 = smul.u32 128, %s284
        %p286 = scmp.lt.s32.totalorder %s281, 62
        %s287 = scalar_select %p286, %s281, 62
        %s288 = smul.addr %s287, 8
        %s289 = scalar_lea.vmem %s0, %s288
        %s290 = smul.u32 32, %s18
        %s291 = ssub.s32 63, %s290
        %p292 = scmp.lt.s32.totalorder %s291, 32
        %s293 = scalar_select %p292, %s291, 32
        %s294 = smul.u32 128, %s293
        %s295 = smul.u32 32, %s18
        %s296 = ssub.s32 63, %s295
        %p297 = scmp.lt.s32.totalorder %s296, 32
        %s298 = scalar_select %p297, %s296, 32
        %s299 = smul.u32 128, %s298
        %v301 = vld [vmem:[%s289] sm:$0xff]
        %v302 = vld [vmem:[%s289 + $0x8] sm:$0xff]
        %v303 = vld [vmem:[%s289 + $0x10] sm:$0xff]
        %v304 = vld [vmem:[%s289 + $0x18] sm:$0xff]
        %v305 = vld [vmem:[%s289 + $0x20] sm:$0xff]
        %v306 = vld [vmem:[%s289 + $0x28] sm:$0xff]
        %v307 = vld [vmem:[%s289 + $0x30] sm:$0xff]
        %v308 = vld [vmem:[%s289 + $0x38] sm:$0xff]
        %v309 = vld [vmem:[%s289 + $0x40] sm:$0xff]
        %v310 = vld [vmem:[%s289 + $0x48] sm:$0xff]
        %v311 = vld [vmem:[%s289 + $0x50] sm:$0xff]
        %v312 = vld [vmem:[%s289 + $0x58] sm:$0xff]
        %v313 = vld [vmem:[%s289 + $0x60] sm:$0xff]
        %v314 = vld [vmem:[%s289 + $0x68] sm:$0xff]
        %v315 = vld [vmem:[%s289 + $0x70] sm:$0xff]
        %v316 = vld [vmem:[%s289 + $0x78] sm:$0xff]
        %v317 = vld [vmem:[%s289 + $0x80] sm:$0xff]
        %v318 = vld [vmem:[%s289 + $0x88] sm:$0xff]
        %v319 = vld [vmem:[%s289 + $0x90] sm:$0xff]
        %v320 = vld [vmem:[%s289 + $0x98] sm:$0xff]
        %v321 = vld [vmem:[%s289 + $0xa0] sm:$0xff]
        %v322 = vld [vmem:[%s289 + $0xa8] sm:$0xff]
        %v323 = vld [vmem:[%s289 + $0xb0] sm:$0xff]
        %v324 = vld [vmem:[%s289 + $0xb8] sm:$0xff]
        %v325 = vld [vmem:[%s289 + $0xc0] sm:$0xff]
        %v326 = vld [vmem:[%s289 + $0xc8] sm:$0xff]
        %v327 = vld [vmem:[%s289 + $0xd0] sm:$0xff]
        %v328 = vld [vmem:[%s289 + $0xd8] sm:$0xff]
        %v329 = vld [vmem:[%s289 + $0xe0] sm:$0xff]
        %v330 = vld [vmem:[%s289 + $0xe8] sm:$0xff]
        %v331 = vld [vmem:[%s289 + $0xf0] sm:$0xff]
        %v332 = vld [vmem:[%s289 + $0xf8] sm:$0xff]
        %v333 = vpack.c.bf16 %v302, %v301
        %v334 = vpack.c.bf16 %v304, %v303
        %v335 = vpack.c.bf16 %v306, %v305
        %v336 = vpack.c.bf16 %v308, %v307
        %v337 = vpack.c.bf16 %v310, %v309
        %v338 = vpack.c.bf16 %v312, %v311
        %v339 = vpack.c.bf16 %v314, %v313
        %v340 = vpack.c.bf16 %v316, %v315
        %v341 = vpack.c.bf16 %v318, %v317
        %v342 = vpack.c.bf16 %v320, %v319
        %v343 = vpack.c.bf16 %v322, %v321
        %v344 = vpack.c.bf16 %v324, %v323
        %v345 = vpack.c.bf16 %v326, %v325
        %v346 = vpack.c.bf16 %v328, %v327
        %v347 = vpack.c.bf16 %v330, %v329
        %v348 = vpack.c.bf16 %v332, %v331
        %v349 = vld [vmem:[%s1] sm:$0xf]
        %v350 = vld [vmem:[%s1 + $0x4] sm:$0xf]
        %v351 = vld [vmem:[%s2] sm:$0x1]
        %v353 = vlaneseq
        %v354 = vshrl.u32 %v353, 7
        %v355 = vsub.s32 0, %v354
        %v356 = vrot.slane %v351, %v355
        %v360 = vunpack.c.l.b16 %v349
        %v361 = vunpack.c.l.b16 %v350
        %v362 = vpack.c.b16 %v361, %v360
        %vm364 = vcmask 130048
        %v366 = vsel %vm364, %v333, 0
        %v369 = vsel %vm364, %v334, 0
        %v372 = vsel %vm364, %v335, 0
        %v375 = vsel %vm364, %v336, 0
        %v378 = vsel %vm364, %v337, 0
        %v381 = vsel %vm364, %v338, 0
        %v384 = vsel %vm364, %v339, 0
        %v387 = vsel %vm364, %v340, 0
        %v390 = vsel %vm364, %v341, 0
        %v393 = vsel %vm364, %v342, 0
        %v396 = vsel %vm364, %v343, 0
        %v399 = vsel %vm364, %v344, 0
        %v402 = vsel %vm364, %v345, 0
        %v405 = vsel %vm364, %v346, 0
        %v408 = vsel %vm364, %v347, 0
        %v411 = vsel %vm364, %v348, 0
        %413 = vmatprep.subr.bf16.mxu0 0
        %414 = vmatpush1.bf16.msra.mxu0 0
        %415 = vmatprep.subr.bf16.mxu0 0
        %416 = vmatpush1.bf16.msra.mxu0 0
        %417 = vmatprep.subr.bf16.mxu0 0
        %418 = vmatpush1.bf16.msra.mxu0 0
        %419 = vmatprep.subr.bf16.mxu0 0
        %420 = vmatpush1.bf16.msra.mxu0 0
        %421 = vmatprep.subr.bf16.mxu0 0
        %422 = vmatpush1.bf16.msra.mxu0 0
        %423 = vmatprep.subr.bf16.mxu0 0
        %424 = vmatpush1.bf16.msra.mxu0 0
        %425 = vmatprep.subr.bf16.mxu0 0
        %426 = vmatpush1.bf16.msra.mxu0 0
        %427 = vmatprep.subr.bf16.mxu0 0
        %428 = vmatpush1.bf16.msra.mxu0 %v362
        %429 = vmatprep.subr.bf16.mxu0 0
        %430 = vmatpush2.bf16.msra.mxu0 0
        %431 = vmatprep.subr.bf16.mxu0 0
        %432 = vmatpush2.bf16.msra.mxu0 0
        %433 = vmatprep.subr.bf16.mxu0 0
        %434 = vmatpush2.bf16.msra.mxu0 0
        %435 = vmatprep.subr.bf16.mxu0 0
        %436 = vmatpush2.bf16.msra.mxu0 0
        %437 = vmatprep.subr.bf16.mxu0 0
        %438 = vmatpush2.bf16.msra.mxu0 0
        %439 = vmatprep.subr.bf16.mxu0 0
        %440 = vmatpush2.bf16.msra.mxu0 0
        %441 = vmatprep.subr.bf16.mxu0 0
        %442 = vmatpush2.bf16.msra.mxu0 0
        %443 = vmatprep.subr.bf16.mxu0 0
        %444 = vmatpush2.bf16.msra.mxu0 0
        %445 = vmatprep.mubr.bf16.mxu0 0
        %446 = vmatmul.mubr.bf16.gmra.mxu0 %v366
        %v447 = vpop.f32.mrf.mxu0
        %v448 = vadd.f32 %v356, %v447
        %v449 = vpop.f32.mrf.mxu0
        %v450 = vpop.f32.mrf.mxu0
        %v451 = vadd.f32 %v356, %v450
        %v452 = vpop.f32.mrf.mxu0
        %453 = vmatprep.mubr.bf16.mxu0 0
        %454 = vmatmul.mubr.bf16.gmra.mxu0 %v369
        %v455 = vpop.f32.mrf.mxu0
        %v456 = vadd.f32 %v356, %v455
        %v457 = vpop.f32.mrf.mxu0
        %v458 = vpop.f32.mrf.mxu0
        %v459 = vadd.f32 %v356, %v458
        %v460 = vpop.f32.mrf.mxu0
        %461 = vmatprep.mubr.bf16.mxu0 0
        %462 = vmatmul.mubr.bf16.gmra.mxu0 %v372
        %v463 = vpop.f32.mrf.mxu0
        %v464 = vadd.f32 %v356, %v463
        %v465 = vpop.f32.mrf.mxu0
        %v466 = vpop.f32.mrf.mxu0
        %v467 = vadd.f32 %v356, %v466
        %v468 = vpop.f32.mrf.mxu0
        %469 = vmatprep.mubr.bf16.mxu0 0
        %470 = vmatmul.mubr.bf16.gmra.mxu0 %v375
        %v471 = vpop.f32.mrf.mxu0
        %v472 = vadd.f32 %v356, %v471
        %v473 = vpop.f32.mrf.mxu0
        %v474 = vpop.f32.mrf.mxu0
        %v475 = vadd.f32 %v356, %v474
        %v476 = vpop.f32.mrf.mxu0
        %477 = vmatprep.mubr.bf16.mxu0 0
        %478 = vmatmul.mubr.bf16.gmra.mxu0 %v378
        %v479 = vpop.f32.mrf.mxu0
        %v480 = vadd.f32 %v356, %v479
        %v481 = vpop.f32.mrf.mxu0
        %v482 = vpop.f32.mrf.mxu0
        %v483 = vadd.f32 %v356, %v482
        %v484 = vpop.f32.mrf.mxu0
        %485 = vmatprep.mubr.bf16.mxu0 0
        %486 = vmatmul.mubr.bf16.gmra.mxu0 %v381
        %v487 = vpop.f32.mrf.mxu0
        %v488 = vadd.f32 %v356, %v487
        %v489 = vpop.f32.mrf.mxu0
        %v490 = vpop.f32.mrf.mxu0
        %v491 = vadd.f32 %v356, %v490
        %v492 = vpop.f32.mrf.mxu0
        %493 = vmatprep.mubr.bf16.mxu0 0
        %494 = vmatmul.mubr.bf16.gmra.mxu0 %v384
        %v495 = vpop.f32.mrf.mxu0
        %v496 = vadd.f32 %v356, %v495
        %v497 = vpop.f32.mrf.mxu0
        %v498 = vpop.f32.mrf.mxu0
        %v499 = vadd.f32 %v356, %v498
        %v500 = vpop.f32.mrf.mxu0
        %501 = vmatprep.mubr.bf16.mxu0 0
        %502 = vmatmul.mubr.bf16.gmra.mxu0 %v387
        %v503 = vpop.f32.mrf.mxu0
        %v504 = vadd.f32 %v356, %v503
        %v505 = vpop.f32.mrf.mxu0
        %v506 = vpop.f32.mrf.mxu0
        %v507 = vadd.f32 %v356, %v506
        %v508 = vpop.f32.mrf.mxu0
        %509 = vmatprep.mubr.bf16.mxu0 0
        %510 = vmatmul.mubr.bf16.gmra.mxu0 %v390
        %v511 = vpop.f32.mrf.mxu0
        %v512 = vadd.f32 %v356, %v511
        %v513 = vpop.f32.mrf.mxu0
        %v514 = vpop.f32.mrf.mxu0
        %v515 = vadd.f32 %v356, %v514
        %v516 = vpop.f32.mrf.mxu0
        %517 = vmatprep.mubr.bf16.mxu0 0
        %518 = vmatmul.mubr.bf16.gmra.mxu0 %v393
        %v519 = vpop.f32.mrf.mxu0
        %v520 = vadd.f32 %v356, %v519
        %v521 = vpop.f32.mrf.mxu0
        %v522 = vpop.f32.mrf.mxu0
        %v523 = vadd.f32 %v356, %v522
        %v524 = vpop.f32.mrf.mxu0
        %525 = vmatprep.mubr.bf16.mxu0 0
        %526 = vmatmul.mubr.bf16.gmra.mxu0 %v396
        %v527 = vpop.f32.mrf.mxu0
        %v528 = vadd.f32 %v356, %v527
        %v529 = vpop.f32.mrf.mxu0
        %v530 = vpop.f32.mrf.mxu0
        %v531 = vadd.f32 %v356, %v530
        %v532 = vpop.f32.mrf.mxu0
        %533 = vmatprep.mubr.bf16.mxu0 0
        %534 = vmatmul.mubr.bf16.gmra.mxu0 %v399
        %v535 = vpop.f32.mrf.mxu0
        %v536 = vadd.f32 %v356, %v535
        %v537 = vpop.f32.mrf.mxu0
        %v538 = vpop.f32.mrf.mxu0
        %v539 = vadd.f32 %v356, %v538
        %v540 = vpop.f32.mrf.mxu0
        %541 = vmatprep.mubr.bf16.mxu0 0
        %542 = vmatmul.mubr.bf16.gmra.mxu0 %v402
        %v543 = vpop.f32.mrf.mxu0
        %v544 = vadd.f32 %v356, %v543
        %v545 = vpop.f32.mrf.mxu0
        %v546 = vpop.f32.mrf.mxu0
        %v547 = vadd.f32 %v356, %v546
        %v548 = vpop.f32.mrf.mxu0
        %549 = vmatprep.mubr.bf16.mxu0 0
        %550 = vmatmul.mubr.bf16.gmra.mxu0 %v405
        %v551 = vpop.f32.mrf.mxu0
        %v552 = vadd.f32 %v356, %v551
        %v553 = vpop.f32.mrf.mxu0
        %v554 = vpop.f32.mrf.mxu0
        %v555 = vadd.f32 %v356, %v554
        %v556 = vpop.f32.mrf.mxu0
        %557 = vmatprep.mubr.bf16.mxu0 0
        %558 = vmatmul.mubr.bf16.gmra.mxu0 %v408
        %v559 = vpop.f32.mrf.mxu0
        %v560 = vadd.f32 %v356, %v559
        %v561 = vpop.f32.mrf.mxu0
        %v562 = vpop.f32.mrf.mxu0
        %v563 = vadd.f32 %v356, %v562
        %v564 = vpop.f32.mrf.mxu0
        %565 = vmatprep.mubr.bf16.mxu0 0
        %566 = vmatmul.mubr.bf16.gmra.mxu0 %v411
        %v567 = vpop.f32.mrf.mxu0
        %v568 = vadd.f32 %v356, %v567
        %v569 = vpop.f32.mrf.mxu0
        %v570 = vpop.f32.mrf.mxu0
        %v571 = vadd.f32 %v356, %v570
        %v572 = vpop.f32.mrf.mxu0
        %573 = vdwg.mxu0
        %v574 = vmax.f32 %v448, 0.0
        %v575 = vmax.f32 %v451, 0.0
        %v576 = vmax.f32 %v456, 0.0
        %v577 = vmax.f32 %v459, 0.0
        %v578 = vmax.f32 %v464, 0.0
        %v579 = vmax.f32 %v467, 0.0
        %v580 = vmax.f32 %v472, 0.0
        %v581 = vmax.f32 %v475, 0.0
        %v582 = vmax.f32 %v480, 0.0
        %v583 = vmax.f32 %v483, 0.0
        %v584 = vmax.f32 %v488, 0.0
        %v585 = vmax.f32 %v491, 0.0
        %v586 = vmax.f32 %v496, 0.0
        %v587 = vmax.f32 %v499, 0.0
        %v588 = vmax.f32 %v504, 0.0
        %v589 = vmax.f32 %v507, 0.0
        %v590 = vmax.f32 %v512, 0.0
        %v591 = vmax.f32 %v515, 0.0
        %v592 = vmax.f32 %v520, 0.0
        %v593 = vmax.f32 %v523, 0.0
        %v594 = vmax.f32 %v528, 0.0
        %v595 = vmax.f32 %v531, 0.0
        %v596 = vmax.f32 %v536, 0.0
        %v597 = vmax.f32 %v539, 0.0
        %v598 = vmax.f32 %v544, 0.0
        %v599 = vmax.f32 %v547, 0.0
        %v600 = vmax.f32 %v552, 0.0
        %v601 = vmax.f32 %v555, 0.0
        %v602 = vmax.f32 %v560, 0.0
        %v603 = vmax.f32 %v563, 0.0
        %v604 = vmax.f32 %v568, 0.0
        %v605 = vmax.f32 %v571, 0.0
        %v606 = vpack.c.bf16 %v575, %v574
        %v607 = vpack.c.bf16 %v577, %v576
        %v608 = vpack.c.bf16 %v579, %v578
        %v609 = vpack.c.bf16 %v581, %v580
        %v610 = vpack.c.bf16 %v583, %v582
        %v611 = vpack.c.bf16 %v585, %v584
        %v612 = vpack.c.bf16 %v587, %v586
        %v613 = vpack.c.bf16 %v589, %v588
        %v614 = vpack.c.bf16 %v591, %v590
        %v615 = vpack.c.bf16 %v593, %v592
        %v616 = vpack.c.bf16 %v595, %v594
        %v617 = vpack.c.bf16 %v597, %v596
        %v618 = vpack.c.bf16 %v599, %v598
        %v619 = vpack.c.bf16 %v601, %v600
        %v620 = vpack.c.bf16 %v603, %v602
        %v621 = vpack.c.bf16 %v605, %v604
        %v622 = vld [vmem:[%s3] sm:$0xf]
        %v623 = vld [vmem:[%s3 + $0x4] sm:$0xf]
        %v624 = vld [vmem:[%s3 + $0x8] sm:$0xf]
        %v625 = vld [vmem:[%s3 + $0xc] sm:$0xf]
        %v626 = vld [vmem:[%s3 + $0x10] sm:$0xf]
        %v627 = vld [vmem:[%s3 + $0x14] sm:$0xf]
        %v628 = vld [vmem:[%s3 + $0x18] sm:$0xf]
        %v629 = vld [vmem:[%s3 + $0x1c] sm:$0xf]
        %v630 = vld [vmem:[%s3 + $0x20] sm:$0xf]
        %v631 = vld [vmem:[%s3 + $0x24] sm:$0xf]
        %v632 = vld [vmem:[%s3 + $0x28] sm:$0xf]
        %v633 = vld [vmem:[%s3 + $0x2c] sm:$0xf]
        %v634 = vld [vmem:[%s3 + $0x30] sm:$0xf]
        %v635 = vld [vmem:[%s3 + $0x34] sm:$0xf]
        %v636 = vld [vmem:[%s3 + $0x38] sm:$0xf]
        %v637 = vld [vmem:[%s3 + $0x3c] sm:$0xf]
        %v638 = vld [vmem:[%s4] sm:$0x1]
        %v640 = vlaneseq
        %v641 = vshrl.u32 %v640, 7
        %v642 = vsub.s32 0, %v641
        %v643 = vrot.slane %v638, %v642
        %v661 = vunpack.c.l.b16 %v622
        %v662 = vunpack.c.l.b16 %v623
        %v663 = vunpack.c.l.b16 %v624
        %v664 = vunpack.c.l.b16 %v625
        %v665 = vunpack.c.l.b16 %v626
        %v666 = vunpack.c.l.b16 %v627
        %v667 = vunpack.c.l.b16 %v628
        %v668 = vunpack.c.l.b16 %v629
        %v669 = vunpack.c.l.b16 %v630
        %v670 = vunpack.c.l.b16 %v631
        %v671 = vunpack.c.l.b16 %v632
        %v672 = vunpack.c.l.b16 %v633
        %v673 = vunpack.c.l.b16 %v634
        %v674 = vunpack.c.l.b16 %v635
        %v675 = vunpack.c.l.b16 %v636
        %v676 = vunpack.c.l.b16 %v637
        %v677 = vpack.c.b16 %v662, %v661
        %v678 = vpack.c.b16 %v664, %v663
        %v679 = vpack.c.b16 %v666, %v665
        %v680 = vpack.c.b16 %v668, %v667
        %v681 = vpack.c.b16 %v670, %v669
        %v682 = vpack.c.b16 %v672, %v671
        %v683 = vpack.c.b16 %v674, %v673
        %v684 = vpack.c.b16 %v676, %v675
        %693 = vmatprep.subr.bf16.mxu0 0
        %694 = vmatpush1.bf16.msra.mxu0 %v684
        %695 = vmatprep.subr.bf16.mxu0 0
        %696 = vmatpush1.bf16.msra.mxu0 %v683
        %697 = vmatprep.subr.bf16.mxu0 0
        %698 = vmatpush1.bf16.msra.mxu0 %v682
        %699 = vmatprep.subr.bf16.mxu0 0
        %700 = vmatpush1.bf16.msra.mxu0 %v681
        %701 = vmatprep.subr.bf16.mxu0 0
        %702 = vmatpush1.bf16.msra.mxu0 %v680
        %703 = vmatprep.subr.bf16.mxu0 0
        %704 = vmatpush1.bf16.msra.mxu0 %v679
        %705 = vmatprep.subr.bf16.mxu0 0
        %706 = vmatpush1.bf16.msra.mxu0 %v678
        %707 = vmatprep.subr.bf16.mxu0 0
        %708 = vmatpush1.bf16.msra.mxu0 %v677
        %709 = vmatprep.subr.bf16.mxu0 0
        %710 = vmatpush2.bf16.msra.mxu0 0
        %711 = vmatprep.subr.bf16.mxu0 0
        %712 = vmatpush2.bf16.msra.mxu0 0
        %713 = vmatprep.subr.bf16.mxu0 0
        %714 = vmatpush2.bf16.msra.mxu0 0
        %715 = vmatprep.subr.bf16.mxu0 0
        %716 = vmatpush2.bf16.msra.mxu0 0
        %717 = vmatprep.subr.bf16.mxu0 0
        %718 = vmatpush2.bf16.msra.mxu0 0
        %719 = vmatprep.subr.bf16.mxu0 0
        %720 = vmatpush2.bf16.msra.mxu0 0
        %721 = vmatprep.subr.bf16.mxu0 0
        %722 = vmatpush2.bf16.msra.mxu0 0
        %723 = vmatprep.subr.bf16.mxu0 0
        %724 = vmatpush2.bf16.msra.mxu0 0
        %725 = vmatprep.mubr.bf16.mxu0 0
        %726 = vmatmul.mubr.bf16.gmra.mxu0 %v606
        %v727 = vpop.f32.mrf.mxu0
        %v728 = vadd.f32 %v643, %v727
        %v729 = vpop.f32.mrf.mxu0
        %v730 = vpop.f32.mrf.mxu0
        %v731 = vadd.f32 %v643, %v730
        %v732 = vpop.f32.mrf.mxu0
        %733 = vmatprep.mubr.bf16.mxu0 0
        %734 = vmatmul.mubr.bf16.gmra.mxu0 %v607
        %v735 = vpop.f32.mrf.mxu0
        %v736 = vadd.f32 %v643, %v735
        %v737 = vpop.f32.mrf.mxu0
        %v738 = vpop.f32.mrf.mxu0
        %v739 = vadd.f32 %v643, %v738
        %v740 = vpop.f32.mrf.mxu0
        %741 = vmatprep.mubr.bf16.mxu0 0
        %742 = vmatmul.mubr.bf16.gmra.mxu0 %v608
        %v743 = vpop.f32.mrf.mxu0
        %v744 = vadd.f32 %v643, %v743
        %v745 = vpop.f32.mrf.mxu0
        %v746 = vpop.f32.mrf.mxu0
        %v747 = vadd.f32 %v643, %v746
        %v748 = vpop.f32.mrf.mxu0
        %749 = vmatprep.mubr.bf16.mxu0 0
        %750 = vmatmul.mubr.bf16.gmra.mxu0 %v609
        %v751 = vpop.f32.mrf.mxu0
        %v752 = vadd.f32 %v643, %v751
        %v753 = vpop.f32.mrf.mxu0
        %v754 = vpop.f32.mrf.mxu0
        %v755 = vadd.f32 %v643, %v754
        %v756 = vpop.f32.mrf.mxu0
        %757 = vmatprep.mubr.bf16.mxu0 0
        %758 = vmatmul.mubr.bf16.gmra.mxu0 %v610
        %v759 = vpop.f32.mrf.mxu0
        %v760 = vadd.f32 %v643, %v759
        %v761 = vpop.f32.mrf.mxu0
        %v762 = vpop.f32.mrf.mxu0
        %v763 = vadd.f32 %v643, %v762
        %v764 = vpop.f32.mrf.mxu0
        %765 = vmatprep.mubr.bf16.mxu0 0
        %766 = vmatmul.mubr.bf16.gmra.mxu0 %v611
        %v767 = vpop.f32.mrf.mxu0
        %v768 = vadd.f32 %v643, %v767
        %v769 = vpop.f32.mrf.mxu0
        %v770 = vpop.f32.mrf.mxu0
        %v771 = vadd.f32 %v643, %v770
        %v772 = vpop.f32.mrf.mxu0
        %773 = vmatprep.mubr.bf16.mxu0 0
        %774 = vmatmul.mubr.bf16.gmra.mxu0 %v612
        %v775 = vpop.f32.mrf.mxu0
        %v776 = vadd.f32 %v643, %v775
        %v777 = vpop.f32.mrf.mxu0
        %v778 = vpop.f32.mrf.mxu0
        %v779 = vadd.f32 %v643, %v778
        %v780 = vpop.f32.mrf.mxu0
        %781 = vmatprep.mubr.bf16.mxu0 0
        %782 = vmatmul.mubr.bf16.gmra.mxu0 %v613
        %v783 = vpop.f32.mrf.mxu0
        %v784 = vadd.f32 %v643, %v783
        %v785 = vpop.f32.mrf.mxu0
        %v786 = vpop.f32.mrf.mxu0
        %v787 = vadd.f32 %v643, %v786
        %v788 = vpop.f32.mrf.mxu0
        %789 = vmatprep.mubr.bf16.mxu0 0
        %790 = vmatmul.mubr.bf16.gmra.mxu0 %v614
        %v791 = vpop.f32.mrf.mxu0
        %v792 = vadd.f32 %v643, %v791
        %v793 = vpop.f32.mrf.mxu0
        %v794 = vpop.f32.mrf.mxu0
        %v795 = vadd.f32 %v643, %v794
        %v796 = vpop.f32.mrf.mxu0
        %797 = vmatprep.mubr.bf16.mxu0 0
        %798 = vmatmul.mubr.bf16.gmra.mxu0 %v615
        %v799 = vpop.f32.mrf.mxu0
        %v800 = vadd.f32 %v643, %v799
        %v801 = vpop.f32.mrf.mxu0
        %v802 = vpop.f32.mrf.mxu0
        %v803 = vadd.f32 %v643, %v802
        %v804 = vpop.f32.mrf.mxu0
        %805 = vmatprep.mubr.bf16.mxu0 0
        %806 = vmatmul.mubr.bf16.gmra.mxu0 %v616
        %v807 = vpop.f32.mrf.mxu0
        %v808 = vadd.f32 %v643, %v807
        %v809 = vpop.f32.mrf.mxu0
        %v810 = vpop.f32.mrf.mxu0
        %v811 = vadd.f32 %v643, %v810
        %v812 = vpop.f32.mrf.mxu0
        %813 = vmatprep.mubr.bf16.mxu0 0
        %814 = vmatmul.mubr.bf16.gmra.mxu0 %v617
        %v815 = vpop.f32.mrf.mxu0
        %v816 = vadd.f32 %v643, %v815
        %v817 = vpop.f32.mrf.mxu0
        %v818 = vpop.f32.mrf.mxu0
        %v819 = vadd.f32 %v643, %v818
        %v820 = vpop.f32.mrf.mxu0
        %821 = vmatprep.mubr.bf16.mxu0 0
        %822 = vmatmul.mubr.bf16.gmra.mxu0 %v618
        %v823 = vpop.f32.mrf.mxu0
        %v824 = vadd.f32 %v643, %v823
        %v825 = vpop.f32.mrf.mxu0
        %v826 = vpop.f32.mrf.mxu0
        %v827 = vadd.f32 %v643, %v826
        %v828 = vpop.f32.mrf.mxu0
        %829 = vmatprep.mubr.bf16.mxu0 0
        %830 = vmatmul.mubr.bf16.gmra.mxu0 %v619
        %v831 = vpop.f32.mrf.mxu0
        %v832 = vadd.f32 %v643, %v831
        %v833 = vpop.f32.mrf.mxu0
        %v834 = vpop.f32.mrf.mxu0
        %v835 = vadd.f32 %v643, %v834
        %v836 = vpop.f32.mrf.mxu0
        %837 = vmatprep.mubr.bf16.mxu0 0
        %838 = vmatmul.mubr.bf16.gmra.mxu0 %v620
        %v839 = vpop.f32.mrf.mxu0
        %v840 = vadd.f32 %v643, %v839
        %v841 = vpop.f32.mrf.mxu0
        %v842 = vpop.f32.mrf.mxu0
        %v843 = vadd.f32 %v643, %v842
        %v844 = vpop.f32.mrf.mxu0
        %845 = vmatprep.mubr.bf16.mxu0 0
        %846 = vmatmul.mubr.bf16.gmra.mxu0 %v621
        %v847 = vpop.f32.mrf.mxu0
        %v848 = vadd.f32 %v643, %v847
        %v849 = vpop.f32.mrf.mxu0
        %v850 = vpop.f32.mrf.mxu0
        %v851 = vadd.f32 %v643, %v850
        %v852 = vpop.f32.mrf.mxu0
        %853 = vdwg.mxu0
        %v854 = vmax.f32 %v728, 0.0
        %v855 = vmax.f32 %v731, 0.0
        %v856 = vmax.f32 %v736, 0.0
        %v857 = vmax.f32 %v739, 0.0
        %v858 = vmax.f32 %v744, 0.0
        %v859 = vmax.f32 %v747, 0.0
        %v860 = vmax.f32 %v752, 0.0
        %v861 = vmax.f32 %v755, 0.0
        %v862 = vmax.f32 %v760, 0.0
        %v863 = vmax.f32 %v763, 0.0
        %v864 = vmax.f32 %v768, 0.0
        %v865 = vmax.f32 %v771, 0.0
        %v866 = vmax.f32 %v776, 0.0
        %v867 = vmax.f32 %v779, 0.0
        %v868 = vmax.f32 %v784, 0.0
        %v869 = vmax.f32 %v787, 0.0
        %v870 = vmax.f32 %v792, 0.0
        %v871 = vmax.f32 %v795, 0.0
        %v872 = vmax.f32 %v800, 0.0
        %v873 = vmax.f32 %v803, 0.0
        %v874 = vmax.f32 %v808, 0.0
        %v875 = vmax.f32 %v811, 0.0
        %v876 = vmax.f32 %v816, 0.0
        %v877 = vmax.f32 %v819, 0.0
        %v878 = vmax.f32 %v824, 0.0
        %v879 = vmax.f32 %v827, 0.0
        %v880 = vmax.f32 %v832, 0.0
        %v881 = vmax.f32 %v835, 0.0
        %v882 = vmax.f32 %v840, 0.0
        %v883 = vmax.f32 %v843, 0.0
        %v884 = vmax.f32 %v848, 0.0
        %v885 = vmax.f32 %v851, 0.0
        %v886 = vpack.c.bf16 %v855, %v854
        %v887 = vpack.c.bf16 %v857, %v856
        %v888 = vpack.c.bf16 %v859, %v858
        %v889 = vpack.c.bf16 %v861, %v860
        %v890 = vpack.c.bf16 %v863, %v862
        %v891 = vpack.c.bf16 %v865, %v864
        %v892 = vpack.c.bf16 %v867, %v866
        %v893 = vpack.c.bf16 %v869, %v868
        %v894 = vpack.c.bf16 %v871, %v870
        %v895 = vpack.c.bf16 %v873, %v872
        %v896 = vpack.c.bf16 %v875, %v874
        %v897 = vpack.c.bf16 %v877, %v876
        %v898 = vpack.c.bf16 %v879, %v878
        %v899 = vpack.c.bf16 %v881, %v880
        %v900 = vpack.c.bf16 %v883, %v882
        %v901 = vpack.c.bf16 %v885, %v884
        %v902 = vld [vmem:[%s5] sm:$0xf]
        %v903 = vld [vmem:[%s5 + $0x4] sm:$0xf]
        %v904 = vld [vmem:[%s5 + $0x8] sm:$0xf]
        %v905 = vld [vmem:[%s5 + $0xc] sm:$0xf]
        %v906 = vld [vmem:[%s5 + $0x10] sm:$0xf]
        %v907 = vld [vmem:[%s5 + $0x14] sm:$0xf]
        %v908 = vld [vmem:[%s5 + $0x18] sm:$0xf]
        %v909 = vld [vmem:[%s5 + $0x1c] sm:$0xf]
        %v910 = vld [vmem:[%s5 + $0x20] sm:$0xf]
        %v911 = vld [vmem:[%s5 + $0x24] sm:$0xf]
        %v912 = vld [vmem:[%s5 + $0x28] sm:$0xf]
        %v913 = vld [vmem:[%s5 + $0x2c] sm:$0xf]
        %v914 = vld [vmem:[%s5 + $0x30] sm:$0xf]
        %v915 = vld [vmem:[%s5 + $0x34] sm:$0xf]
        %v916 = vld [vmem:[%s5 + $0x38] sm:$0xf]
        %v917 = vld [vmem:[%s5 + $0x3c] sm:$0xf]
        %v918 = vld [vmem:[%s6] sm:$0x1]
        %v920 = vlaneseq
        %v921 = vshrl.u32 %v920, 7
        %v922 = vsub.s32 0, %v921
        %v923 = vrot.slane %v918, %v922
        %v941 = vunpack.c.l.b16 %v902
        %v942 = vunpack.c.l.b16 %v903
        %v943 = vunpack.c.l.b16 %v904
        %v944 = vunpack.c.l.b16 %v905
        %v945 = vunpack.c.l.b16 %v906
        %v946 = vunpack.c.l.b16 %v907
        %v947 = vunpack.c.l.b16 %v908
        %v948 = vunpack.c.l.b16 %v909
        %v949 = vunpack.c.l.b16 %v910
        %v950 = vunpack.c.l.b16 %v911
        %v951 = vunpack.c.l.b16 %v912
        %v952 = vunpack.c.l.b16 %v913
        %v953 = vunpack.c.l.b16 %v914
        %v954 = vunpack.c.l.b16 %v915
        %v955 = vunpack.c.l.b16 %v916
        %v956 = vunpack.c.l.b16 %v917
        %v957 = vpack.c.b16 %v942, %v941
        %v958 = vpack.c.b16 %v944, %v943
        %v959 = vpack.c.b16 %v946, %v945
        %v960 = vpack.c.b16 %v948, %v947
        %v961 = vpack.c.b16 %v950, %v949
        %v962 = vpack.c.b16 %v952, %v951
        %v963 = vpack.c.b16 %v954, %v953
        %v964 = vpack.c.b16 %v956, %v955
        %973 = vmatprep.subr.bf16.mxu0 0
        %974 = vmatpush1.bf16.msra.mxu0 %v964
        %975 = vmatprep.subr.bf16.mxu0 0
        %976 = vmatpush1.bf16.msra.mxu0 %v963
        %977 = vmatprep.subr.bf16.mxu0 0
        %978 = vmatpush1.bf16.msra.mxu0 %v962
        %979 = vmatprep.subr.bf16.mxu0 0
        %980 = vmatpush1.bf16.msra.mxu0 %v961
        %981 = vmatprep.subr.bf16.mxu0 0
        %982 = vmatpush1.bf16.msra.mxu0 %v960
        %983 = vmatprep.subr.bf16.mxu0 0
        %984 = vmatpush1.bf16.msra.mxu0 %v959
        %985 = vmatprep.subr.bf16.mxu0 0
        %986 = vmatpush1.bf16.msra.mxu0 %v958
        %987 = vmatprep.subr.bf16.mxu0 0
        %988 = vmatpush1.bf16.msra.mxu0 %v957
        %989 = vmatprep.subr.bf16.mxu0 0
        %990 = vmatpush2.bf16.msra.mxu0 0
        %991 = vmatprep.subr.bf16.mxu0 0
        %992 = vmatpush2.bf16.msra.mxu0 0
        %993 = vmatprep.subr.bf16.mxu0 0
        %994 = vmatpush2.bf16.msra.mxu0 0
        %995 = vmatprep.subr.bf16.mxu0 0
        %996 = vmatpush2.bf16.msra.mxu0 0
        %997 = vmatprep.subr.bf16.mxu0 0
        %998 = vmatpush2.bf16.msra.mxu0 0
        %999 = vmatprep.subr.bf16.mxu0 0
        %1000 = vmatpush2.bf16.msra.mxu0 0
        %1001 = vmatprep.subr.bf16.mxu0 0
        %1002 = vmatpush2.bf16.msra.mxu0 0
        %1003 = vmatprep.subr.bf16.mxu0 0
        %1004 = vmatpush2.bf16.msra.mxu0 0
        %1005 = vmatprep.mubr.bf16.mxu0 0
        %1006 = vmatmul.mubr.bf16.gmra.mxu0 %v886
        %v1007 = vpop.f32.mrf.mxu0
        %v1008 = vadd.f32 %v923, %v1007
        %v1009 = vpop.f32.mrf.mxu0
        %v1010 = vpop.f32.mrf.mxu0
        %v1011 = vadd.f32 %v923, %v1010
        %v1012 = vpop.f32.mrf.mxu0
        %1013 = vmatprep.mubr.bf16.mxu0 0
        %1014 = vmatmul.mubr.bf16.gmra.mxu0 %v887
        %v1015 = vpop.f32.mrf.mxu0
        %v1016 = vadd.f32 %v923, %v1015
        %v1017 = vpop.f32.mrf.mxu0
        %v1018 = vpop.f32.mrf.mxu0
        %v1019 = vadd.f32 %v923, %v1018
        %v1020 = vpop.f32.mrf.mxu0
        %1021 = vmatprep.mubr.bf16.mxu0 0
        %1022 = vmatmul.mubr.bf16.gmra.mxu0 %v888
        %v1023 = vpop.f32.mrf.mxu0
        %v1024 = vadd.f32 %v923, %v1023
        %v1025 = vpop.f32.mrf.mxu0
        %v1026 = vpop.f32.mrf.mxu0
        %v1027 = vadd.f32 %v923, %v1026
        %v1028 = vpop.f32.mrf.mxu0
        %1029 = vmatprep.mubr.bf16.mxu0 0
        %1030 = vmatmul.mubr.bf16.gmra.mxu0 %v889
        %v1031 = vpop.f32.mrf.mxu0
        %v1032 = vadd.f32 %v923, %v1031
        %v1033 = vpop.f32.mrf.mxu0
        %v1034 = vpop.f32.mrf.mxu0
        %v1035 = vadd.f32 %v923, %v1034
        %v1036 = vpop.f32.mrf.mxu0
        %1037 = vmatprep.mubr.bf16.mxu0 0
        %1038 = vmatmul.mubr.bf16.gmra.mxu0 %v890
        %v1039 = vpop.f32.mrf.mxu0
        %v1040 = vadd.f32 %v923, %v1039
        %v1041 = vpop.f32.mrf.mxu0
        %v1042 = vpop.f32.mrf.mxu0
        %v1043 = vadd.f32 %v923, %v1042
        %v1044 = vpop.f32.mrf.mxu0
        %1045 = vmatprep.mubr.bf16.mxu0 0
        %1046 = vmatmul.mubr.bf16.gmra.mxu0 %v891
        %v1047 = vpop.f32.mrf.mxu0
        %v1048 = vadd.f32 %v923, %v1047
        %v1049 = vpop.f32.mrf.mxu0
        %v1050 = vpop.f32.mrf.mxu0
        %v1051 = vadd.f32 %v923, %v1050
        %v1052 = vpop.f32.mrf.mxu0
        %1053 = vmatprep.mubr.bf16.mxu0 0
        %1054 = vmatmul.mubr.bf16.gmra.mxu0 %v892
        %v1055 = vpop.f32.mrf.mxu0
        %v1056 = vadd.f32 %v923, %v1055
        %v1057 = vpop.f32.mrf.mxu0
        %v1058 = vpop.f32.mrf.mxu0
        %v1059 = vadd.f32 %v923, %v1058
        %v1060 = vpop.f32.mrf.mxu0
        %1061 = vmatprep.mubr.bf16.mxu0 0
        %1062 = vmatmul.mubr.bf16.gmra.mxu0 %v893
        %v1063 = vpop.f32.mrf.mxu0
        %v1064 = vadd.f32 %v923, %v1063
        %v1065 = vpop.f32.mrf.mxu0
        %v1066 = vpop.f32.mrf.mxu0
        %v1067 = vadd.f32 %v923, %v1066
        %v1068 = vpop.f32.mrf.mxu0
        %1069 = vmatprep.mubr.bf16.mxu0 0
        %1070 = vmatmul.mubr.bf16.gmra.mxu0 %v894
        %v1071 = vpop.f32.mrf.mxu0
        %v1072 = vadd.f32 %v923, %v1071
        %v1073 = vpop.f32.mrf.mxu0
        %v1074 = vpop.f32.mrf.mxu0
        %v1075 = vadd.f32 %v923, %v1074
        %v1076 = vpop.f32.mrf.mxu0
        %1077 = vmatprep.mubr.bf16.mxu0 0
        %1078 = vmatmul.mubr.bf16.gmra.mxu0 %v895
        %v1079 = vpop.f32.mrf.mxu0
        %v1080 = vadd.f32 %v923, %v1079
        %v1081 = vpop.f32.mrf.mxu0
        %v1082 = vpop.f32.mrf.mxu0
        %v1083 = vadd.f32 %v923, %v1082
        %v1084 = vpop.f32.mrf.mxu0
        %1085 = vmatprep.mubr.bf16.mxu0 0
        %1086 = vmatmul.mubr.bf16.gmra.mxu0 %v896
        %v1087 = vpop.f32.mrf.mxu0
        %v1088 = vadd.f32 %v923, %v1087
        %v1089 = vpop.f32.mrf.mxu0
        %v1090 = vpop.f32.mrf.mxu0
        %v1091 = vadd.f32 %v923, %v1090
        %v1092 = vpop.f32.mrf.mxu0
        %1093 = vmatprep.mubr.bf16.mxu0 0
        %1094 = vmatmul.mubr.bf16.gmra.mxu0 %v897
        %v1095 = vpop.f32.mrf.mxu0
        %v1096 = vadd.f32 %v923, %v1095
        %v1097 = vpop.f32.mrf.mxu0
        %v1098 = vpop.f32.mrf.mxu0
        %v1099 = vadd.f32 %v923, %v1098
        %v1100 = vpop.f32.mrf.mxu0
        %1101 = vmatprep.mubr.bf16.mxu0 0
        %1102 = vmatmul.mubr.bf16.gmra.mxu0 %v898
        %v1103 = vpop.f32.mrf.mxu0
        %v1104 = vadd.f32 %v923, %v1103
        %v1105 = vpop.f32.mrf.mxu0
        %v1106 = vpop.f32.mrf.mxu0
        %v1107 = vadd.f32 %v923, %v1106
        %v1108 = vpop.f32.mrf.mxu0
        %1109 = vmatprep.mubr.bf16.mxu0 0
        %1110 = vmatmul.mubr.bf16.gmra.mxu0 %v899
        %v1111 = vpop.f32.mrf.mxu0
        %v1112 = vadd.f32 %v923, %v1111
        %v1113 = vpop.f32.mrf.mxu0
        %v1114 = vpop.f32.mrf.mxu0
        %v1115 = vadd.f32 %v923, %v1114
        %v1116 = vpop.f32.mrf.mxu0
        %1117 = vmatprep.mubr.bf16.mxu0 0
        %1118 = vmatmul.mubr.bf16.gmra.mxu0 %v900
        %v1119 = vpop.f32.mrf.mxu0
        %v1120 = vadd.f32 %v923, %v1119
        %v1121 = vpop.f32.mrf.mxu0
        %v1122 = vpop.f32.mrf.mxu0
        %v1123 = vadd.f32 %v923, %v1122
        %v1124 = vpop.f32.mrf.mxu0
        %1125 = vmatprep.mubr.bf16.mxu0 0
        %1126 = vmatmul.mubr.bf16.gmra.mxu0 %v901
        %v1127 = vpop.f32.mrf.mxu0
        %v1128 = vadd.f32 %v923, %v1127
        %v1129 = vpop.f32.mrf.mxu0
        %v1130 = vpop.f32.mrf.mxu0
        %v1131 = vadd.f32 %v923, %v1130
        %v1132 = vpop.f32.mrf.mxu0
        %1133 = vdwg.mxu0
        %vm1134 = vcmask 64512
        %1135 = vst.msk [vmem:[%s280] sm:$0xff] %vm1134, %v1008
        %1136 = vst.msk [vmem:[%s280 + $0x8] sm:$0xff] %vm1134, %v1011
        %1137 = vst.msk [vmem:[%s280 + $0x10] sm:$0xff] %vm1134, %v1016
        %1138 = vst.msk [vmem:[%s280 + $0x18] sm:$0xff] %vm1134, %v1019
        %1139 = vst.msk [vmem:[%s280 + $0x20] sm:$0xff] %vm1134, %v1024
        %1140 = vst.msk [vmem:[%s280 + $0x28] sm:$0xff] %vm1134, %v1027
        %1141 = vst.msk [vmem:[%s280 + $0x30] sm:$0xff] %vm1134, %v1032
        %1142 = vst.msk [vmem:[%s280 + $0x38] sm:$0xff] %vm1134, %v1035
        %1143 = vst.msk [vmem:[%s280 + $0x40] sm:$0xff] %vm1134, %v1040
        %1144 = vst.msk [vmem:[%s280 + $0x48] sm:$0xff] %vm1134, %v1043
        %1145 = vst.msk [vmem:[%s280 + $0x50] sm:$0xff] %vm1134, %v1048
        %1146 = vst.msk [vmem:[%s280 + $0x58] sm:$0xff] %vm1134, %v1051
        %1147 = vst.msk [vmem:[%s280 + $0x60] sm:$0xff] %vm1134, %v1056
        %1148 = vst.msk [vmem:[%s280 + $0x68] sm:$0xff] %vm1134, %v1059
        %1149 = vst.msk [vmem:[%s280 + $0x70] sm:$0xff] %vm1134, %v1064
        %1150 = vst.msk [vmem:[%s280 + $0x78] sm:$0xff] %vm1134, %v1067
        %1151 = vst.msk [vmem:[%s280 + $0x80] sm:$0xff] %vm1134, %v1072
        %1152 = vst.msk [vmem:[%s280 + $0x88] sm:$0xff] %vm1134, %v1075
        %1153 = vst.msk [vmem:[%s280 + $0x90] sm:$0xff] %vm1134, %v1080
        %1154 = vst.msk [vmem:[%s280 + $0x98] sm:$0xff] %vm1134, %v1083
        %1155 = vst.msk [vmem:[%s280 + $0xa0] sm:$0xff] %vm1134, %v1088
        %1156 = vst.msk [vmem:[%s280 + $0xa8] sm:$0xff] %vm1134, %v1091
        %1157 = vst.msk [vmem:[%s280 + $0xb0] sm:$0xff] %vm1134, %v1096
        %1158 = vst.msk [vmem:[%s280 + $0xb8] sm:$0xff] %vm1134, %v1099
        %1159 = vst.msk [vmem:[%s280 + $0xc0] sm:$0xff] %vm1134, %v1104
        %1160 = vst.msk [vmem:[%s280 + $0xc8] sm:$0xff] %vm1134, %v1107
        %1161 = vst.msk [vmem:[%s280 + $0xd0] sm:$0xff] %vm1134, %v1112
        %1162 = vst.msk [vmem:[%s280 + $0xd8] sm:$0xff] %vm1134, %v1115
        %1163 = vst.msk [vmem:[%s280 + $0xe0] sm:$0xff] %vm1134, %v1120
        %1164 = vst.msk [vmem:[%s280 + $0xe8] sm:$0xff] %vm1134, %v1123
        %1165 = vst.msk [vmem:[%s280 + $0xf0] sm:$0xff] %vm1134, %v1128
        %1166 = vst.msk [vmem:[%s280 + $0xf8] sm:$0xff] %vm1134, %v1131
        %s1167 = sand.u32 %s178, 1
        %s1168 = sand.u32 %s178, 1
        %s1169 = smul.addr %s1168, 256
        %s1170 = scalar_lea.vmem [#allocation2], %s1169
        // Predicated region
        $region49: #{nn_forward.1} parent=47 // pred_check
          %p1171 = pneg %p188
        $region50: #{nn_forward.1} parent=47 // pred_check_branch
          %1173 = sbr.rel (%p1171) target = $region52
        $region51: #{nn_forward.1} parent=47 // pred_region
          %s1174 = smul.u32 32, %s18
          %s1175 = ssub.s32 63, %s1174
          %p1176 = scmp.lt.s32.totalorder %s1175, 32
          %s1177 = scalar_select %p1176, %s1175, 32
          %s1178 = smul.u32 128, %s1177
          %p1179 = scmp.ne.s32.totalorder 0, %s1178
          %s1180 = smul.addr %s1174, 8
          %s1181 = scalar_lea.vmem %s7, %s1180
          // Predicated region
          $region53: #{nn_forward.1} parent=51 // pred_check
            %p1182 = pneg %p1179
          $region54: #{nn_forward.1} parent=51 // pred_check_branch
            %1184 = sbr.rel (%p1182) target = $region56
          $region55: #{nn_forward.1} parent=51 // pred_region
            // Predicated region
            $region57: #{nn_forward.1} parent=55 // pred_check
              _
            $region58: #{nn_forward.1} parent=55 // pred_check_branch
              %1186 = sbr.rel (0) target = $region60
            $region59: #{nn_forward.1} parent=55 // pred_region
              // Predicated region
              $region79: #{nn_forward.1} parent=59 // pred_check
                _
              $region80: #{nn_forward.1} parent=59 // pred_check_branch
                %1298 = sbr.rel (0) target = $region82
              $region81: #{nn_forward.1} parent=59 // pred_region
                %s1299 = sshrl.u32 %s1177, 5
                // While loop
                $region83: #{nn_forward.1} parent=81 // loop_pre_header
                  _
                $region84: #{nn_forward.1} parent=81 // loop_header
                  %s1301 = sphi 0, %s1303
                  %p1302 = scmp.ge.s32.totalorder %s1301, %s1299
                  %s1306 = sphi 0, %s1375
                  %s1307 = sphi %s1170, %s1378
                  %s1308 = sphi %s1181, %s1379
                $region85: #{nn_forward.1} parent=81 // loop_header_branch
                  %1305 = sbr.rel (%p1302) target = $region89
                $region86: #{nn_forward.1} parent=81 // loop_body
                  %v1309 = vld [vmem:[%s1307] sm:$0xff]
                  %1310 = vst [vmem:[%s1308] sm:$0xff] %v1309
                  %v1311 = vld [vmem:[%s1307 + $0x8] sm:$0xff]
                  %1312 = vst [vmem:[%s1308 + $0x8] sm:$0xff] %v1311
                  %v1313 = vld [vmem:[%s1307 + $0x10] sm:$0xff]
                  %1314 = vst [vmem:[%s1308 + $0x10] sm:$0xff] %v1313
                  %v1315 = vld [vmem:[%s1307 + $0x18] sm:$0xff]
                  %1316 = vst [vmem:[%s1308 + $0x18] sm:$0xff] %v1315
                  %v1317 = vld [vmem:[%s1307 + $0x20] sm:$0xff]
                  %1318 = vst [vmem:[%s1308 + $0x20] sm:$0xff] %v1317
                  %v1319 = vld [vmem:[%s1307 + $0x28] sm:$0xff]
                  %1320 = vst [vmem:[%s1308 + $0x28] sm:$0xff] %v1319
                  %v1321 = vld [vmem:[%s1307 + $0x30] sm:$0xff]
                  %1322 = vst [vmem:[%s1308 + $0x30] sm:$0xff] %v1321
                  %v1323 = vld [vmem:[%s1307 + $0x38] sm:$0xff]
                  %1324 = vst [vmem:[%s1308 + $0x38] sm:$0xff] %v1323
                  %v1325 = vld [vmem:[%s1307 + $0x40] sm:$0xff]
                  %1326 = vst [vmem:[%s1308 + $0x40] sm:$0xff] %v1325
                  %v1327 = vld [vmem:[%s1307 + $0x48] sm:$0xff]
                  %1328 = vst [vmem:[%s1308 + $0x48] sm:$0xff] %v1327
                  %v1329 = vld [vmem:[%s1307 + $0x50] sm:$0xff]
                  %1330 = vst [vmem:[%s1308 + $0x50] sm:$0xff] %v1329
                  %v1331 = vld [vmem:[%s1307 + $0x58] sm:$0xff]
                  %1332 = vst [vmem:[%s1308 + $0x58] sm:$0xff] %v1331
                  %v1333 = vld [vmem:[%s1307 + $0x60] sm:$0xff]
                  %1334 = vst [vmem:[%s1308 + $0x60] sm:$0xff] %v1333
                  %v1335 = vld [vmem:[%s1307 + $0x68] sm:$0xff]
                  %1336 = vst [vmem:[%s1308 + $0x68] sm:$0xff] %v1335
                  %v1337 = vld [vmem:[%s1307 + $0x70] sm:$0xff]
                  %1338 = vst [vmem:[%s1308 + $0x70] sm:$0xff] %v1337
                  %v1339 = vld [vmem:[%s1307 + $0x78] sm:$0xff]
                  %1340 = vst [vmem:[%s1308 + $0x78] sm:$0xff] %v1339
                  %v1341 = vld [vmem:[%s1307 + $0x80] sm:$0xff]
                  %1342 = vst [vmem:[%s1308 + $0x80] sm:$0xff] %v1341
                  %v1343 = vld [vmem:[%s1307 + $0x88] sm:$0xff]
                  %1344 = vst [vmem:[%s1308 + $0x88] sm:$0xff] %v1343
                  %v1345 = vld [vmem:[%s1307 + $0x90] sm:$0xff]
                  %1346 = vst [vmem:[%s1308 + $0x90] sm:$0xff] %v1345
                  %v1347 = vld [vmem:[%s1307 + $0x98] sm:$0xff]
                  %1348 = vst [vmem:[%s1308 + $0x98] sm:$0xff] %v1347
                  %v1349 = vld [vmem:[%s1307 + $0xa0] sm:$0xff]
                  %1350 = vst [vmem:[%s1308 + $0xa0] sm:$0xff] %v1349
                  %v1351 = vld [vmem:[%s1307 + $0xa8] sm:$0xff]
                  %1352 = vst [vmem:[%s1308 + $0xa8] sm:$0xff] %v1351
                  %v1353 = vld [vmem:[%s1307 + $0xb0] sm:$0xff]
                  %1354 = vst [vmem:[%s1308 + $0xb0] sm:$0xff] %v1353
                  %v1355 = vld [vmem:[%s1307 + $0xb8] sm:$0xff]
                  %1356 = vst [vmem:[%s1308 + $0xb8] sm:$0xff] %v1355
                  %v1357 = vld [vmem:[%s1307 + $0xc0] sm:$0xff]
                  %1358 = vst [vmem:[%s1308 + $0xc0] sm:$0xff] %v1357
                  %v1359 = vld [vmem:[%s1307 + $0xc8] sm:$0xff]
                  %1360 = vst [vmem:[%s1308 + $0xc8] sm:$0xff] %v1359
                  %v1361 = vld [vmem:[%s1307 + $0xd0] sm:$0xff]
                  %1362 = vst [vmem:[%s1308 + $0xd0] sm:$0xff] %v1361
                  %v1363 = vld [vmem:[%s1307 + $0xd8] sm:$0xff]
                  %1364 = vst [vmem:[%s1308 + $0xd8] sm:$0xff] %v1363
                  %v1365 = vld [vmem:[%s1307 + $0xe0] sm:$0xff]
                  %1366 = vst [vmem:[%s1308 + $0xe0] sm:$0xff] %v1365
                  %v1367 = vld [vmem:[%s1307 + $0xe8] sm:$0xff]
                  %1368 = vst [vmem:[%s1308 + $0xe8] sm:$0xff] %v1367
                  %v1369 = vld [vmem:[%s1307 + $0xf0] sm:$0xff]
                  %1370 = vst [vmem:[%s1308 + $0xf0] sm:$0xff] %v1369
                  %v1371 = vld [vmem:[%s1307 + $0xf8] sm:$0xff]
                  %1372 = vst [vmem:[%s1308 + $0xf8] sm:$0xff] %v1371
                  %s1373 = sadd.s32 1, %s1306
                  %p1374 = scmp.ge.s32.totalorder %s1373, %s1299
                  %s1375 = scalar_select %p1374, 0, %s1373
                  %s1376 = smul.u32 %s1375, 256
                  %s1377 = smul.u32 %s1375, 256
                  %s1378 = scalar_lea.vmem %s1170, %s1376 [#allocation2]
                  %s1379 = scalar_lea.vmem %s1181, %s1377
                $region87: #{nn_forward.1} parent=81 // loop_footer
                  %s1303 = sadd.s32 %s1301, 1
                $region88: #{nn_forward.1} parent=81 // loop_footer_branch
                  %1300 = sbr.rel target = $region84
                $region89: #{nn_forward.1} parent=81 // loop_exit
                  _
                %s1380 = sshrl.u32 %s1177, 5
                %s1381 = sand.u32 %s1177, 31
                %s1382 = smul.u32 %s1380, 32
                %s1383 = smul.u32 8, %s1382
                %s1384 = scalar_lea.vmem %s1170, %s1383 [#allocation2]
                %s1385 = smul.u32 8, %s1382
                %s1386 = scalar_lea.vmem %s1181, %s1385
                // While loop
                $region90: #{nn_forward.1} parent=81 // loop_pre_header
                  _
                $region91: #{nn_forward.1} parent=81 // loop_header
                  %s1388 = sphi 0, %s1390
                  %p1389 = scmp.ge.s32.totalorder %s1388, %s1381
                  %s1393 = sphi 0, %s1400
                  %s1394 = sphi %s1384, %s1403
                  %s1395 = sphi %s1386, %s1404
                $region92: #{nn_forward.1} parent=81 // loop_header_branch
                  %1392 = sbr.rel (%p1389) target = $region96
                $region93: #{nn_forward.1} parent=81 // loop_body
                  %v1396 = vld [vmem:[%s1394] sm:$0xff]
                  %1397 = vst [vmem:[%s1395] sm:$0xff] %v1396
                  %s1398 = sadd.s32 1, %s1393
                  %p1399 = scmp.ge.s32.totalorder %s1398, %s1381
                  %s1400 = scalar_select %p1399, 0, %s1398
                  %s1401 = smul.u32 %s1400, 8
                  %s1402 = smul.u32 %s1400, 8
                  %s1403 = scalar_lea.vmem %s1384, %s1401 [#allocation2]
                  %s1404 = scalar_lea.vmem %s1386, %s1402
                $region94: #{nn_forward.1} parent=81 // loop_footer
                  %s1390 = sadd.s32 %s1388, 1
                $region95: #{nn_forward.1} parent=81 // loop_footer_branch
                  %1387 = sbr.rel target = $region91
                $region96: #{nn_forward.1} parent=81 // loop_exit
                  _
              $region82: #{nn_forward.1} parent=59 // pred_fallthru
                _
              // Predicated region
              $region97: #{nn_forward.1} parent=59 // pred_check
                _
              $region98: #{nn_forward.1} parent=59 // pred_check_branch
                %1406 = sbr.rel target = $region100
              $region99: #{nn_forward.1} parent=59 // pred_region
                _
              $region100: #{nn_forward.1} parent=59 // pred_fallthru
                _
            $region60: #{nn_forward.1} parent=55 // pred_fallthru
              _
            // Predicated region
            $region61: #{nn_forward.1} parent=55 // pred_check
              _
            $region62: #{nn_forward.1} parent=55 // pred_check_branch
              %1188 = sbr.rel target = $region64
            $region63: #{nn_forward.1} parent=55 // pred_region
              %s1190 = ssub.s32 256, 1
              %s1191 = sshrl.u32 %s1177, 5
              // While loop
              $region65: #{nn_forward.1} parent=63 // loop_pre_header
                _
              $region66: #{nn_forward.1} parent=63 // loop_header
                %s1193 = sphi 0, %s1195
                %p1194 = scmp.ge.s32.totalorder %s1193, %s1191
                %s1198 = sphi 0, %s1267
                %s1199 = sphi %s1170, %s1270
                %s1200 = sphi %s1181, %s1271
              $region67: #{nn_forward.1} parent=63 // loop_header_branch
                %1197 = sbr.rel (%p1194) target = $region71
              $region68: #{nn_forward.1} parent=63 // loop_body
                %v1201 = vld [vmem:[%s1199] sm:%s1190]
                %1202 = vst [vmem:[%s1200] sm:%s1190] %v1201
                %v1203 = vld [vmem:[%s1199 + $0x8] sm:%s1190]
                %1204 = vst [vmem:[%s1200 + $0x8] sm:%s1190] %v1203
                %v1205 = vld [vmem:[%s1199 + $0x10] sm:%s1190]
                %1206 = vst [vmem:[%s1200 + $0x10] sm:%s1190] %v1205
                %v1207 = vld [vmem:[%s1199 + $0x18] sm:%s1190]
                %1208 = vst [vmem:[%s1200 + $0x18] sm:%s1190] %v1207
                %v1209 = vld [vmem:[%s1199 + $0x20] sm:%s1190]
                %1210 = vst [vmem:[%s1200 + $0x20] sm:%s1190] %v1209
                %v1211 = vld [vmem:[%s1199 + $0x28] sm:%s1190]
                %1212 = vst [vmem:[%s1200 + $0x28] sm:%s1190] %v1211
                %v1213 = vld [vmem:[%s1199 + $0x30] sm:%s1190]
                %1214 = vst [vmem:[%s1200 + $0x30] sm:%s1190] %v1213
                %v1215 = vld [vmem:[%s1199 + $0x38] sm:%s1190]
                %1216 = vst [vmem:[%s1200 + $0x38] sm:%s1190] %v1215
                %v1217 = vld [vmem:[%s1199 + $0x40] sm:%s1190]
                %1218 = vst [vmem:[%s1200 + $0x40] sm:%s1190] %v1217
                %v1219 = vld [vmem:[%s1199 + $0x48] sm:%s1190]
                %1220 = vst [vmem:[%s1200 + $0x48] sm:%s1190] %v1219
                %v1221 = vld [vmem:[%s1199 + $0x50] sm:%s1190]
                %1222 = vst [vmem:[%s1200 + $0x50] sm:%s1190] %v1221
                %v1223 = vld [vmem:[%s1199 + $0x58] sm:%s1190]
                %1224 = vst [vmem:[%s1200 + $0x58] sm:%s1190] %v1223
                %v1225 = vld [vmem:[%s1199 + $0x60] sm:%s1190]
                %1226 = vst [vmem:[%s1200 + $0x60] sm:%s1190] %v1225
                %v1227 = vld [vmem:[%s1199 + $0x68] sm:%s1190]
                %1228 = vst [vmem:[%s1200 + $0x68] sm:%s1190] %v1227
                %v1229 = vld [vmem:[%s1199 + $0x70] sm:%s1190]
                %1230 = vst [vmem:[%s1200 + $0x70] sm:%s1190] %v1229
                %v1231 = vld [vmem:[%s1199 + $0x78] sm:%s1190]
                %1232 = vst [vmem:[%s1200 + $0x78] sm:%s1190] %v1231
                %v1233 = vld [vmem:[%s1199 + $0x80] sm:%s1190]
                %1234 = vst [vmem:[%s1200 + $0x80] sm:%s1190] %v1233
                %v1235 = vld [vmem:[%s1199 + $0x88] sm:%s1190]
                %1236 = vst [vmem:[%s1200 + $0x88] sm:%s1190] %v1235
                %v1237 = vld [vmem:[%s1199 + $0x90] sm:%s1190]
                %1238 = vst [vmem:[%s1200 + $0x90] sm:%s1190] %v1237
                %v1239 = vld [vmem:[%s1199 + $0x98] sm:%s1190]
                %1240 = vst [vmem:[%s1200 + $0x98] sm:%s1190] %v1239
                %v1241 = vld [vmem:[%s1199 + $0xa0] sm:%s1190]
                %1242 = vst [vmem:[%s1200 + $0xa0] sm:%s1190] %v1241
                %v1243 = vld [vmem:[%s1199 + $0xa8] sm:%s1190]
                %1244 = vst [vmem:[%s1200 + $0xa8] sm:%s1190] %v1243
                %v1245 = vld [vmem:[%s1199 + $0xb0] sm:%s1190]
                %1246 = vst [vmem:[%s1200 + $0xb0] sm:%s1190] %v1245
                %v1247 = vld [vmem:[%s1199 + $0xb8] sm:%s1190]
                %1248 = vst [vmem:[%s1200 + $0xb8] sm:%s1190] %v1247
                %v1249 = vld [vmem:[%s1199 + $0xc0] sm:%s1190]
                %1250 = vst [vmem:[%s1200 + $0xc0] sm:%s1190] %v1249
                %v1251 = vld [vmem:[%s1199 + $0xc8] sm:%s1190]
                %1252 = vst [vmem:[%s1200 + $0xc8] sm:%s1190] %v1251
                %v1253 = vld [vmem:[%s1199 + $0xd0] sm:%s1190]
                %1254 = vst [vmem:[%s1200 + $0xd0] sm:%s1190] %v1253
                %v1255 = vld [vmem:[%s1199 + $0xd8] sm:%s1190]
                %1256 = vst [vmem:[%s1200 + $0xd8] sm:%s1190] %v1255
                %v1257 = vld [vmem:[%s1199 + $0xe0] sm:%s1190]
                %1258 = vst [vmem:[%s1200 + $0xe0] sm:%s1190] %v1257
                %v1259 = vld [vmem:[%s1199 + $0xe8] sm:%s1190]
                %1260 = vst [vmem:[%s1200 + $0xe8] sm:%s1190] %v1259
                %v1261 = vld [vmem:[%s1199 + $0xf0] sm:%s1190]
                %1262 = vst [vmem:[%s1200 + $0xf0] sm:%s1190] %v1261
                %v1263 = vld [vmem:[%s1199 + $0xf8] sm:%s1190]
                %1264 = vst [vmem:[%s1200 + $0xf8] sm:%s1190] %v1263
                %s1265 = sadd.s32 1, %s1198
                %p1266 = scmp.ge.s32.totalorder %s1265, %s1191
                %s1267 = scalar_select %p1266, 0, %s1265
                %s1268 = smul.u32 %s1267, 256
                %s1269 = smul.u32 %s1267, 256
                %s1270 = scalar_lea.vmem %s1170, %s1268 [#allocation2]
                %s1271 = scalar_lea.vmem %s1181, %s1269
              $region69: #{nn_forward.1} parent=63 // loop_footer
                %s1195 = sadd.s32 %s1193, 1
              $region70: #{nn_forward.1} parent=63 // loop_footer_branch
                %1192 = sbr.rel target = $region66
              $region71: #{nn_forward.1} parent=63 // loop_exit
                _
              %s1272 = sshrl.u32 %s1177, 5
              %s1273 = sand.u32 %s1177, 31
              %s1274 = smul.u32 %s1272, 32
              %s1275 = smul.u32 8, %s1274
              %s1276 = scalar_lea.vmem %s1170, %s1275 [#allocation2]
              %s1277 = smul.u32 8, %s1274
              %s1278 = scalar_lea.vmem %s1181, %s1277
              // While loop
              $region72: #{nn_forward.1} parent=63 // loop_pre_header
                _
              $region73: #{nn_forward.1} parent=63 // loop_header
                %s1280 = sphi 0, %s1282
                %p1281 = scmp.ge.s32.totalorder %s1280, %s1273
                %s1285 = sphi 0, %s1292
                %s1286 = sphi %s1276, %s1295
                %s1287 = sphi %s1278, %s1296
              $region74: #{nn_forward.1} parent=63 // loop_header_branch
                %1284 = sbr.rel (%p1281) target = $region78
              $region75: #{nn_forward.1} parent=63 // loop_body
                %v1288 = vld [vmem:[%s1286] sm:%s1190]
                %1289 = vst [vmem:[%s1287] sm:%s1190] %v1288
                %s1290 = sadd.s32 1, %s1285
                %p1291 = scmp.ge.s32.totalorder %s1290, %s1273
                %s1292 = scalar_select %p1291, 0, %s1290
                %s1293 = smul.u32 %s1292, 8
                %s1294 = smul.u32 %s1292, 8
                %s1295 = scalar_lea.vmem %s1276, %s1293 [#allocation2]
                %s1296 = scalar_lea.vmem %s1278, %s1294
              $region76: #{nn_forward.1} parent=63 // loop_footer
                %s1282 = sadd.s32 %s1280, 1
              $region77: #{nn_forward.1} parent=63 // loop_footer_branch
                %1279 = sbr.rel target = $region73
              $region78: #{nn_forward.1} parent=63 // loop_exit
                _
            $region64: #{nn_forward.1} parent=55 // pred_fallthru
              _
          $region56: #{nn_forward.1} parent=51 // pred_fallthru
            _
          %1407 = vnop
        $region52: #{nn_forward.1} parent=47 // pred_fallthru
          _
      $region48: #{nn_forward.1} parent=5 // pred_fallthru
        _
      %p1408 = scmp.le.s32.totalorder 2, %s13
      // Predicated region
      $region101: #{nn_forward.1} parent=5 // pred_check
        %p1409 = pneg %p1408
      $region102: #{nn_forward.1} parent=5 // pred_check_branch
        %1411 = sbr.rel (%p1409) target = $region104
      $region103: #{nn_forward.1} parent=5 // pred_region
        %s1412 = ssub.s32 %s13, 2
        // Predicated region
        $region105: #{nn_forward.1} parent=103 // pred_check
          %p1413 = pneg %p194
        $region106: #{nn_forward.1} parent=103 // pred_check_branch
          %1415 = sbr.rel (%p1413) target = $region108
        $region107: #{nn_forward.1} parent=103 // pred_region
          %s1416 = sand.u32 %s179, 1
          %s1417 = sand.u32 %s179, 1
          %s1418 = smul.addr %s1417, 256
          %s1419 = scalar_lea.vmem [#allocation2], %s1418
        $region108: #{nn_forward.1} parent=103 // pred_fallthru
          _
      $region104: #{nn_forward.1} parent=5 // pred_fallthru
        _
    $region6: #{nn_forward.1} parent=1 // loop_footer
      %s17 = sadd.s32 1, %s13
    $region7: #{nn_forward.1} parent=1 // loop_footer_branch
      %12 = sbr.rel target = $region3
    $region8: #{nn_forward.1} parent=1 // loop_exit
      _

</llo_original>
